<compile_context>
chip_gen: v7x
topology: tpu7x:2x2x1
jax: 0.10.0
libtpu: 0.0.40
codegen_flags: <defaults>
</compile_context>

<pallas_src>
import math
import functools

import jax
import jax.numpy as jnp
from jax.experimental import pallas as pl
from jax.experimental.pallas import tpu as pltpu

# ---------------- small config (consistent with the module) -----------------
STATE_DIM   = 64          # Cat_Attention dim (= state_dim)
HEADS       = 8           # Cat_Attention default
DIM_HEAD    = 64          # Cat_Attention default
INNER       = HEADS * DIM_HEAD
HIDDEN      = 32          # hidden_state_dim (small)
ACTION_SIZE = 2
ACTION_STD  = 0.1
SEQ_L       = 4
BATCH       = 2
N_TOKENS    = 8
LOG_2PI     = math.log(2.0 * math.pi)


# ======================= Kernel 1: Cat_Attention =============================
def cat_attention_kernel(x_ref, wqv_ref, wkT_ref, wo_ref, bo_ref, o_ref,
                         *, heads, dim_head):
    inner = heads * dim_head
    x = x_ref[0].astype(jnp.float32)                            # (n, dim)

    # One wide matmul for every head's q and v (scale pre-folded into wq).
    qv = jnp.dot(x, wqv_ref[...], preferred_element_type=jnp.float32)   # (n, 2*inner)
    # All heads' k, already transposed: one x transpose instead of 8 k.T's.
    kT = jnp.dot(wkT_ref[...], x.T, preferred_element_type=jnp.float32)  # (inner, n)

    outs = []
    for h in range(heads):                                      # static unroll over heads
        q_h = qv[:, h * dim_head:(h + 1) * dim_head]            # (n, dh)
        v_h = qv[:, inner + h * dim_head: inner + (h + 1) * dim_head]
        kT_h = kT[h * dim_head:(h + 1) * dim_head, :]           # (dh, n)
        dots = jnp.dot(q_h, kT_h, preferred_element_type=jnp.float32)   # (n, n)
        dots = dots - jnp.max(dots, axis=-1, keepdims=True)
        e = jnp.exp(dots)
        attn = e / jnp.sum(e, axis=-1, keepdims=True)           # exact softmax (1e-3 parity)
        outs.append(jnp.dot(attn, v_h, preferred_element_type=jnp.float32))  # (n, dh)

    out_cat = jnp.concatenate(outs, axis=-1)                    # (n, inner) lane concat
    o_ref[0] = (jnp.dot(out_cat, wo_ref[...], preferred_element_type=jnp.float32)
                + bo_ref[...])


def cat_attention(x, prep, *, heads=HEADS, dim_head=DIM_HEAD):
    """x: (B, n, dim) -> (B, n, dim).  Dropout is 0.0 => identity.
    B independent attention instances are processed by one pallas_call;
    weights use a constant index_map so they stay VMEM-resident."""
    B, n, dim = x.shape
    kern = functools.partial(cat_attention_kernel, heads=heads, dim_head=dim_head)
    return pl.pallas_call(
        kern,
        out_shape=jax.ShapeDtypeStruct((B, n, dim), jnp.float32),
        grid=(B,),
        in_specs=[
            pl.BlockSpec((1, n, dim), lambda i: (i, 0, 0)),
            pl.BlockSpec(prep['w_qv'].shape, lambda i: (0, 0)),   # resident weights
            pl.BlockSpec(prep['w_kT'].shape, lambda i: (0, 0)),
            pl.BlockSpec(prep['w_out'].shape, lambda i: (0, 0)),
            pl.BlockSpec(prep['b_out'].shape, lambda i: (0, 0)),
        ],
        out_specs=pl.BlockSpec((1, n, dim), lambda i: (i, 0, 0)),
        compiler_params=pltpu.CompilerParams(dimension_semantics=("parallel",)),
    )(x, prep['w_qv'], prep['w_kT'], prep['w_out'], prep['b_out'])


# =============== Kernel 2: evaluate() = GRU + actor/critic + MVN =============
def evaluate_kernel(state_ref, action_ref, w_gru_ref, b_gru_ref,
                    w_head_ref, b_head_ref, inv_std_ref, lp_const_ref,
                    out_ref, *, seq_l, hidden, action_size):
    H = hidden
    A = action_size
    batch = state_ref.shape[2]

    w_gru = w_gru_ref[...]                                      # (2H, 4H) fused GRU weights
    b_gru = b_gru_ref[...]                                      # (1, 4H)
    w_head = w_head_ref[...]                                    # (H, A+1) fused actor|critic
    b_head = b_head_ref[...]                                    # (1, A+1)
    inv_std = inv_std_ref[...]                                  # (1, A)
    lp_const = lp_const_ref[...]                                # (1, 1): -(log_det + A/2*log2pi)

    # h0 = zeros (as in evaluate()); carried in vregs across the unrolled loop
    h = jnp.zeros((batch, H), jnp.float32)
    rows = []

    for t in range(seq_l):                                      # static unroll over time
        x_t = state_ref[0, t].astype(jnp.float32)               # (batch, H)

        # fused GRU cell: one (batch, 2H) @ (2H, 4H) matmul per step
        #   lanes [0:2H)  = (W_ir x + W_hr h + b_r) | (W_iz x + W_hz h + b_z)
        #   lanes [2H:3H) = W_in x + b_in
        #   lanes [3H:4H) = W_hn h + b_hn
        xh = jnp.concatenate([x_t, h], axis=-1)                 # (batch, 2H)
        g = jnp.dot(xh, w_gru, preferred_element_type=jnp.float32) + b_gru
        rz = jax.nn.sigmoid(g[:, :2 * H])
        r = rz[:, :H]
        z = rz[:, H:2 * H]
        ng = jnp.tanh(g[:, 2 * H:3 * H] + r * g[:, 3 * H:4 * H])
        h = (1.0 - z) * ng + z * h

        # fused actor (Linear+Sigmoid) and critic (Linear) heads: one matmul
        head = jnp.dot(h, w_head, preferred_element_type=jnp.float32) + b_head
        mean = jax.nn.sigmoid(head[:, :A])                      # (batch, A)
        value = head[:, A:A + 1]                                # (batch, 1)

        # diag-MVN log_prob (scale_tril = diag(action_std))
        act = action_ref[0, t].astype(jnp.float32)              # (batch, A)
        diff = (act - mean) * inv_std
        lp = -0.5 * jnp.sum(diff * diff, axis=-1, keepdims=True) + lp_const  # (batch, 1)

        rows.append(jnp.concatenate([lp, value], axis=-1))      # (batch, 2)

    # single deferred store for the whole sequence
    out_ref[0] = jnp.stack(rows, axis=0)                        # (seq_l, batch, 2)


def evaluate(state, action, prep):
    """state: (seq_l, batch, hidden) or (items, seq_l, batch, hidden);
    action with matching leading dims and last dim action_size.
    Returns (logprobs, values, entropy) shaped like the module's evaluate()
    (with the extra leading item axis if one was provided)."""
    squeeze = state.ndim == 3
    if squeeze:
        state, action = state[None], action[None]
    E, seq_l, batch, H = state.shape
    A = action.shape[-1]

    kern = functools.partial(evaluate_kernel, seq_l=seq_l, hidden=H, action_size=A)
    out = pl.pallas_call(
        kern,
        out_shape=jax.ShapeDtypeStruct((E, seq_l, batch, 2), jnp.float32),
        grid=(E,),
        in_specs=[
            pl.BlockSpec((1, seq_l, batch, H), lambda i: (i, 0, 0, 0)),
            pl.BlockSpec((1, seq_l, batch, A), lambda i: (i, 0, 0, 0)),
            pl.BlockSpec(prep['w_gru'].shape, lambda i: (0, 0)),     # resident weights
            pl.BlockSpec(prep['b_gru'].shape, lambda i: (0, 0)),
            pl.BlockSpec(prep['w_head'].shape, lambda i: (0, 0)),
            pl.BlockSpec(prep['b_head'].shape, lambda i: (0, 0)),
            pl.BlockSpec(prep['inv_std'].shape, lambda i: (0, 0)),
            pl.BlockSpec(prep['lp_const'].shape, lambda i: (0, 0)),
        ],
        out_specs=pl.BlockSpec((1, seq_l, batch, 2), lambda i: (i, 0, 0, 0)),
        compiler_params=pltpu.CompilerParams(dimension_semantics=("parallel",)),
    )(state, action, prep['w_gru'], prep['b_gru'], prep['w_head'],
      prep['b_head'], prep['inv_std'], prep['lp_const'])

    lp, value = out[..., 0], out[..., 1]
    ent = jnp.broadcast_to(prep['entropy'], lp.shape)           # constant, wrapper-side
    if squeeze:
        lp, value, ent = lp[0], value[0], ent[0]
    return lp, value, ent


# ===================== one-time parameter preparation ========================
def prepare_params(p, *, heads=HEADS, dim_head=DIM_HEAD):
    """One-time re-layout of the module's parameters (run once per parameter
    update, NOT per call): per-head packing, scale folding, GRU/head fusion,
    std-derived constants."""
    inner = heads * dim_head
    scale = dim_head ** (-0.5)
    wq = p['w_qkv'][:, :inner] * scale            # fold softmax scale into q weights
    wk = p['w_qkv'][:, inner:2 * inner]
    wv = p['w_qkv'][:, 2 * inner:]

    H = p['w_ih'].shape[0]
    A = p['w_act'].shape[1]
    zero = jnp.zeros((H, H), jnp.float32)
    # fused GRU weights: rows [x | h], columns [rz | in | hn]
    w_gru = jnp.concatenate([
        jnp.concatenate([p['w_ih'][:, :2 * H], p['w_ih'][:, 2 * H:], zero], axis=1),
        jnp.concatenate([p['w_hh'][:, :2 * H], zero, p['w_hh'][:, 2 * H:]], axis=1),
    ], axis=0)                                                   # (2H, 4H)
    b_gru = jnp.concatenate([p['b_ih'][:, :2 * H] + p['b_hh'][:, :2 * H],
                             p['b_ih'][:, 2 * H:], p['b_hh'][:, 2 * H:]], axis=1)  # (1,4H)

    std = p['std']                                               # (1, A)
    log_det = jnp.sum(jnp.log(std))
    return {
        # attention
        'w_qv':   jnp.concatenate([wq, wv], axis=1),             # (dim, 2*inner)
        'w_kT':   wk.T,                                          # (inner, dim)
        'w_out':  p['w_out'],                                    # (inner, dim)
        'b_out':  p['b_out'],                                    # (1, dim)
        # GRU + heads
        'w_gru':  w_gru,
        'b_gru':  b_gru,
        'w_head': jnp.concatenate([p['w_act'], p['w_crit']], axis=1),   # (H, A+1)
        'b_head': jnp.concatenate([p['b_act'], p['b_crit']], axis=1),   # (1, A+1)
        # diag-MVN constants
        'inv_std':  1.0 / std,                                   # (1, A)
        'lp_const': (-log_det - 0.5 * A * LOG_2PI).reshape(1, 1),
        'entropy':  0.5 * A * (1.0 + LOG_2PI) + log_det,         # scalar
    }


# ========================= pure-JAX references ===============================
def cat_attention_ref(x, w_qkv, w_out, b_out, heads=HEADS, dim_head=DIM_HEAD):
    inner = heads * dim_head
    scale = dim_head ** (-0.5)
    b, n, dim = x.shape
    qkv = x @ w_qkv
    q, k, v = jnp.split(qkv, 3, axis=-1)
    to_h = lambda t: t.reshape(b, n, heads, dim_head).transpose(0, 2, 1, 3)
    q, k, v = map(to_h, (q, k, v))
    dots = jnp.einsum('bhnd,bhmd->bhnm', q, k) * scale
    attn = jax.nn.softmax(dots, axis=-1)
    out = jnp.einsum('bhnm,bhmd->bhnd', attn, v)
    out = out.transpose(0, 2, 1, 3).reshape(b, n, inner)
    return out @ w_out + b_out


def evaluate_ref(state, action, p):
    H = state.shape[-1]
    A = action.shape[-1]

    def step(h, x):
        gi = x @ p['w_ih'] + p['b_ih']
        gh = h @ p['w_hh'] + p['b_hh']
        r = jax.nn.sigmoid(gi[:, :H] + gh[:, :H])
        z = jax.nn.sigmoid(gi[:, H:2 * H] + gh[:, H:2 * H])
        n = jnp.tanh(gi[:, 2 * H:] + r * gh[:, 2 * H:])
        h_new = (1.0 - z) * n + z * h
        return h_new, h_new

    h0 = jnp.zeros((state.shape[1], H), jnp.float32)
    _, hs = jax.lax.scan(step, h0, state)                          # (seq, batch, H)
    mean = jax.nn.sigmoid(hs @ p['w_act'] + p['b_act'])
    value = (hs @ p['w_crit'] + p['b_crit'])[..., 0]
    std = p['std'][0]
    diff = (action - mean) / std
    log_det = jnp.sum(jnp.log(std))
    lp = -0.5 * jnp.sum(diff * diff, axis=-1) - log_det - 0.5 * A * LOG_2PI
    ent = jnp.full_like(lp, 0.5 * A * (1.0 + LOG_2PI) + log_det)
    return lp, value, ent


# ============================ parameter init =================================
def init_params(key):
    ks = jax.random.split(key, 12)

    def u(k, shape, fan_in):
        b = 1.0 / math.sqrt(fan_in)
        return jax.random.uniform(k, shape, jnp.float32, -b, b)

    return {
        # Cat_Attention(dim=STATE_DIM): to_qkv (no bias), to_out (with bias)
        'w_qkv':  u(ks[0], (STATE_DIM, 3 * INNER), STATE_DIM),
        'w_out':  u(ks[1], (INNER, STATE_DIM), INNER),
        'b_out':  u(ks[2], (1, STATE_DIM), INNER),
        # GRU(hidden, hidden) — weights stored transposed: (in, 3*hidden), gate order [r,z,n]
        'w_ih':   u(ks[3], (HIDDEN, 3 * HIDDEN), HIDDEN),
        'w_hh':   u(ks[4], (HIDDEN, 3 * HIDDEN), HIDDEN),
        'b_ih':   u(ks[5], (1, 3 * HIDDEN), HIDDEN),
        'b_hh':   u(ks[6], (1, 3 * HIDDEN), HIDDEN),
        # actor: Linear(hidden, action_size) + Sigmoid ; critic: Linear(hidden, 1)
        'w_act':  u(ks[7], (HIDDEN, ACTION_SIZE), HIDDEN),
        'b_act':  u(ks[8], (1, ACTION_SIZE), HIDDEN),
        'w_crit': u(ks[9], (HIDDEN, 1), HIDDEN),
        'b_crit': u(ks[10], (1, 1), HIDDEN),
        # action_var buffer (filled with action_std, used as scale_tril diag)
        'std':    jnp.full((1, ACTION_SIZE), ACTION_STD, jnp.float32),
    }


# ================================== main =====================================
if __name__ == "__main__":
    key = jax.random.PRNGKey(0)
    kp, k1, k2, k3 = jax.random.split(key, 4)
    params = init_params(kp)
    prep = prepare_params(params)          # one-time re-layout (not per call)

    # process_state_before_act path: old_msg_state -> Cat_Attention -> last token.
    # Several independent env instances are batched behind ONE pallas_call.
    B_ENV = 4
    old_msg_state = jax.random.normal(k1, (B_ENV, N_TOKENS, STATE_DIM), jnp.float32)
    msg_state = cat_attention(old_msg_state, prep)
    merged_msg = msg_state[:, -1:, :]                    # (B_ENV, 1, STATE_DIM) — glue slice

    # evaluate path: several independent sequences batched behind ONE pallas_call.
    N_ENVS = 4
    state = jax.random.normal(k2, (N_ENVS, SEQ_L, BATCH, HIDDEN), jnp.float32)
    action = jax.random.uniform(k3, (N_ENVS, SEQ_L, BATCH, ACTION_SIZE), jnp.float32)
    lp, val, ent = evaluate(state, action, prep)

    jax.block_until_ready((msg_state, merged_msg, lp, val, ent))

    # reference check (full-f32 matmul precision for the reference)
    with jax.default_matmul_precision('float32'):
        attn_ref = cat_attention_ref(old_msg_state, params['w_qkv'],
                                     params['w_out'], params['b_out'])
        lp_r, val_r, ent_r = jax.vmap(
            lambda s, a: evaluate_ref(s, a, params))(state, action)
        jax.block_until_ready((attn_ref, lp_r, val_r, ent_r))

    # exact softmax divide -> 1e-3 parity everywhere
    assert jnp.allclose(msg_state, attn_ref, atol=1e-3, rtol=1e-3)
    assert jnp.allclose(lp, lp_r, atol=1e-3, rtol=1e-3)
    assert jnp.allclose(val, val_r, atol=1e-3, rtol=1e-3)
    assert jnp.allclose(ent, ent_r, atol=1e-3, rtol=1e-3)

    # TODO(synk): act()'s MVN sampling (dist.sample) and Memory list bookkeeping are
    # stochastic/host-side glue and are not implemented as kernels.
    print("KERNEL_OK")
</pallas_src>

<mosaic_0001>
module attributes {stable_mosaic.version = 11 : i64} {
  func.func @cat_attention_kernel(%arg0: i32, %arg1: memref<1x8x64xf32, #tpu.memory_space<vmem>>, %arg2: memref<64x1024xf32, #tpu.memory_space<vmem>>, %arg3: memref<512x64xf32, #tpu.memory_space<vmem>>, %arg4: memref<512x64xf32, #tpu.memory_space<vmem>>, %arg5: memref<1x64xf32, #tpu.memory_space<vmem>>, %arg6: memref<1x8x64xf32, #tpu.memory_space<vmem>>) attributes {dimension_semantics = [#tpu.dimension_semantics<parallel>], iteration_bounds = array<i64: 4>, scalar_prefetch = 0 : i64, scratch_operands = 0 : i64, tpu.core_type = #tpu.core_type<tc>, window_params = [{transform_indices = @transform_0, window_bounds = array<i64: 1, 8, 64>}, {pipeline_mode = #tpu.pipeline_mode<synchronous>, transform_indices = @transform_1, window_bounds = array<i64: 64, 1024>}, {pipeline_mode = #tpu.pipeline_mode<synchronous>, transform_indices = @transform_2, window_bounds = array<i64: 512, 64>}, {pipeline_mode = #tpu.pipeline_mode<synchronous>, transform_indices = @transform_3, window_bounds = array<i64: 512, 64>}, {pipeline_mode = #tpu.pipeline_mode<synchronous>, transform_indices = @transform_4, window_bounds = array<i64: 1, 64>}, {transform_indices = @transform_5, window_bounds = array<i64: 1, 8, 64>}]} {
    %c0 = arith.constant 0 : index
    %c0_0 = arith.constant 0 : index
    %c0_1 = arith.constant 0 : index
    %0 = vector.load %arg1[%c0, %c0_0, %c0_1] : memref<1x8x64xf32, #tpu.memory_space<vmem>>, vector<1x8x64xf32>
    %1 = vector.shape_cast %0 : vector<1x8x64xf32> to vector<8x64xf32>
    %c0_2 = arith.constant 0 : index
    %c0_3 = arith.constant 0 : index
    %2 = vector.load %arg2[%c0_2, %c0_3] : memref<64x1024xf32, #tpu.memory_space<vmem>>, vector<64x1024xf32>
    %cst = arith.constant dense<0.000000e+00> : vector<8x1024xf32>
    %3 = tpu.matmul %1, %2, %cst {dimension_numbers = #tpu.dot_dimension_numbers<[1], [0], [0], [1], [0, 0, 1, 1], [], []>} : vector<8x64xf32>, vector<64x1024xf32>, vector<8x1024xf32> -> vector<8x1024xf32>
    %c0_4 = arith.constant 0 : index
    %c0_5 = arith.constant 0 : index
    %4 = vector.load %arg3[%c0_4, %c0_5] : memref<512x64xf32, #tpu.memory_space<vmem>>, vector<512x64xf32>
    %5 = tpu.transpose %1, [1, 0] : vector<8x64xf32> -> vector<64x8xf32>
    %cst_6 = arith.constant dense<0.000000e+00> : vector<512x8xf32>
    %6 = tpu.matmul %4, %5, %cst_6 {dimension_numbers = #tpu.dot_dimension_numbers<[1], [0], [0], [1], [0, 0, 1, 1], [], []>} : vector<512x64xf32>, vector<64x8xf32>, vector<512x8xf32> -> vector<512x8xf32>
    %7 = vector.extract_strided_slice %3 {offsets = [0, 0], sizes = [8, 64], strides = [1, 1]} : vector<8x1024xf32> to vector<8x64xf32>
    %8 = vector.extract_strided_slice %3 {offsets = [0, 512], sizes = [8, 64], strides = [1, 1]} : vector<8x1024xf32> to vector<8x64xf32>
    %9 = vector.extract_strided_slice %6 {offsets = [0, 0], sizes = [64, 8], strides = [1, 1]} : vector<512x8xf32> to vector<64x8xf32>
    %cst_7 = arith.constant dense<0.000000e+00> : vector<8x8xf32>
    %10 = tpu.matmul %7, %9, %cst_7 {dimension_numbers = #tpu.dot_dimension_numbers<[1], [0], [0], [1], [0, 0, 1, 1], [], []>} : vector<8x64xf32>, vector<64x8xf32>, vector<8x8xf32> -> vector<8x8xf32>
    %cst_8 = arith.constant dense<0xFF800000> : vector<8xf32>
    %11 = vector.multi_reduction <maximumf>, %10, %cst_8 [1] : vector<8x8xf32> to vector<8xf32>
    %12 = vector.shape_cast %11 : vector<8xf32> to vector<8x1xf32>
    %13 = vector.broadcast %12 : vector<8x1xf32> to vector<8x8xf32>
    %14 = arith.subf %10, %13 : vector<8x8xf32>
    %15 = math.exp %14 : vector<8x8xf32>
    %cst_9 = arith.constant dense<0.000000e+00> : vector<8xf32>
    %16 = vector.multi_reduction <add>, %15, %cst_9 [1] : vector<8x8xf32> to vector<8xf32>
    %17 = vector.shape_cast %16 : vector<8xf32> to vector<8x1xf32>
    %18 = vector.broadcast %17 : vector<8x1xf32> to vector<8x8xf32>
    %19 = arith.divf %15, %18 : vector<8x8xf32>
    %cst_10 = arith.constant dense<0.000000e+00> : vector<8x64xf32>
    %20 = tpu.matmul %19, %8, %cst_10 {dimension_numbers = #tpu.dot_dimension_numbers<[1], [0], [0], [1], [0, 0, 1, 1], [], []>} : vector<8x8xf32>, vector<8x64xf32>, vector<8x64xf32> -> vector<8x64xf32>
    %21 = vector.extract_strided_slice %3 {offsets = [0, 64], sizes = [8, 64], strides = [1, 1]} : vector<8x1024xf32> to vector<8x64xf32>
    %22 = vector.extract_strided_slice %3 {offsets = [0, 576], sizes = [8, 64], strides = [1, 1]} : vector<8x1024xf32> to vector<8x64xf32>
    %23 = vector.extract_strided_slice %6 {offsets = [64, 0], sizes = [64, 8], strides = [1, 1]} : vector<512x8xf32> to vector<64x8xf32>
    %cst_11 = arith.constant dense<0.000000e+00> : vector<8x8xf32>
    %24 = tpu.matmul %21, %23, %cst_11 {dimension_numbers = #tpu.dot_dimension_numbers<[1], [0], [0], [1], [0, 0, 1, 1], [], []>} : vector<8x64xf32>, vector<64x8xf32>, vector<8x8xf32> -> vector<8x8xf32>
    %cst_12 = arith.constant dense<0xFF800000> : vector<8xf32>
    %25 = vector.multi_reduction <maximumf>, %24, %cst_12 [1] : vector<8x8xf32> to vector<8xf32>
    %26 = vector.shape_cast %25 : vector<8xf32> to vector<8x1xf32>
    %27 = vector.broadcast %26 : vector<8x1xf32> to vector<8x8xf32>
    %28 = arith.subf %24, %27 : vector<8x8xf32>
    %29 = math.exp %28 : vector<8x8xf32>
    %cst_13 = arith.constant dense<0.000000e+00> : vector<8xf32>
    %30 = vector.multi_reduction <add>, %29, %cst_13 [1] : vector<8x8xf32> to vector<8xf32>
    %31 = vector.shape_cast %30 : vector<8xf32> to vector<8x1xf32>
    %32 = vector.broadcast %31 : vector<8x1xf32> to vector<8x8xf32>
    %33 = arith.divf %29, %32 : vector<8x8xf32>
    %cst_14 = arith.constant dense<0.000000e+00> : vector<8x64xf32>
    %34 = tpu.matmul %33, %22, %cst_14 {dimension_numbers = #tpu.dot_dimension_numbers<[1], [0], [0], [1], [0, 0, 1, 1], [], []>} : vector<8x8xf32>, vector<8x64xf32>, vector<8x64xf32> -> vector<8x64xf32>
    %35 = vector.extract_strided_slice %3 {offsets = [0, 128], sizes = [8, 64], strides = [1, 1]} : vector<8x1024xf32> to vector<8x64xf32>
    %36 = vector.extract_strided_slice %3 {offsets = [0, 640], sizes = [8, 64], strides = [1, 1]} : vector<8x1024xf32> to vector<8x64xf32>
    %37 = vector.extract_strided_slice %6 {offsets = [128, 0], sizes = [64, 8], strides = [1, 1]} : vector<512x8xf32> to vector<64x8xf32>
    %cst_15 = arith.constant dense<0.000000e+00> : vector<8x8xf32>
    %38 = tpu.matmul %35, %37, %cst_15 {dimension_numbers = #tpu.dot_dimension_numbers<[1], [0], [0], [1], [0, 0, 1, 1], [], []>} : vector<8x64xf32>, vector<64x8xf32>, vector<8x8xf32> -> vector<8x8xf32>
    %cst_16 = arith.constant dense<0xFF800000> : vector<8xf32>
    %39 = vector.multi_reduction <maximumf>, %38, %cst_16 [1] : vector<8x8xf32> to vector<8xf32>
    %40 = vector.shape_cast %39 : vector<8xf32> to vector<8x1xf32>
    %41 = vector.broadcast %40 : vector<8x1xf32> to vector<8x8xf32>
    %42 = arith.subf %38, %41 : vector<8x8xf32>
    %43 = math.exp %42 : vector<8x8xf32>
    %cst_17 = arith.constant dense<0.000000e+00> : vector<8xf32>
    %44 = vector.multi_reduction <add>, %43, %cst_17 [1] : vector<8x8xf32> to vector<8xf32>
    %45 = vector.shape_cast %44 : vector<8xf32> to vector<8x1xf32>
    %46 = vector.broadcast %45 : vector<8x1xf32> to vector<8x8xf32>
    %47 = arith.divf %43, %46 : vector<8x8xf32>
    %cst_18 = arith.constant dense<0.000000e+00> : vector<8x64xf32>
    %48 = tpu.matmul %47, %36, %cst_18 {dimension_numbers = #tpu.dot_dimension_numbers<[1], [0], [0], [1], [0, 0, 1, 1], [], []>} : vector<8x8xf32>, vector<8x64xf32>, vector<8x64xf32> -> vector<8x64xf32>
    %49 = vector.extract_strided_slice %3 {offsets = [0, 192], sizes = [8, 64], strides = [1, 1]} : vector<8x1024xf32> to vector<8x64xf32>
    %50 = vector.extract_strided_slice %3 {offsets = [0, 704], sizes = [8, 64], strides = [1, 1]} : vector<8x1024xf32> to vector<8x64xf32>
    %51 = vector.extract_strided_slice %6 {offsets = [192, 0], sizes = [64, 8], strides = [1, 1]} : vector<512x8xf32> to vector<64x8xf32>
    %cst_19 = arith.constant dense<0.000000e+00> : vector<8x8xf32>
    %52 = tpu.matmul %49, %51, %cst_19 {dimension_numbers = #tpu.dot_dimension_numbers<[1], [0], [0], [1], [0, 0, 1, 1], [], []>} : vector<8x64xf32>, vector<64x8xf32>, vector<8x8xf32> -> vector<8x8xf32>
    %cst_20 = arith.constant dense<0xFF800000> : vector<8xf32>
    %53 = vector.multi_reduction <maximumf>, %52, %cst_20 [1] : vector<8x8xf32> to vector<8xf32>
    %54 = vector.shape_cast %53 : vector<8xf32> to vector<8x1xf32>
    %55 = vector.broadcast %54 : vector<8x1xf32> to vector<8x8xf32>
    %56 = arith.subf %52, %55 : vector<8x8xf32>
    %57 = math.exp %56 : vector<8x8xf32>
    %cst_21 = arith.constant dense<0.000000e+00> : vector<8xf32>
    %58 = vector.multi_reduction <add>, %57, %cst_21 [1] : vector<8x8xf32> to vector<8xf32>
    %59 = vector.shape_cast %58 : vector<8xf32> to vector<8x1xf32>
    %60 = vector.broadcast %59 : vector<8x1xf32> to vector<8x8xf32>
    %61 = arith.divf %57, %60 : vector<8x8xf32>
    %cst_22 = arith.constant dense<0.000000e+00> : vector<8x64xf32>
    %62 = tpu.matmul %61, %50, %cst_22 {dimension_numbers = #tpu.dot_dimension_numbers<[1], [0], [0], [1], [0, 0, 1, 1], [], []>} : vector<8x8xf32>, vector<8x64xf32>, vector<8x64xf32> -> vector<8x64xf32>
    %63 = vector.extract_strided_slice %3 {offsets = [0, 256], sizes = [8, 64], strides = [1, 1]} : vector<8x1024xf32> to vector<8x64xf32>
    %64 = vector.extract_strided_slice %3 {offsets = [0, 768], sizes = [8, 64], strides = [1, 1]} : vector<8x1024xf32> to vector<8x64xf32>
    %65 = vector.extract_strided_slice %6 {offsets = [256, 0], sizes = [64, 8], strides = [1, 1]} : vector<512x8xf32> to vector<64x8xf32>
    %cst_23 = arith.constant dense<0.000000e+00> : vector<8x8xf32>
    %66 = tpu.matmul %63, %65, %cst_23 {dimension_numbers = #tpu.dot_dimension_numbers<[1], [0], [0], [1], [0, 0, 1, 1], [], []>} : vector<8x64xf32>, vector<64x8xf32>, vector<8x8xf32> -> vector<8x8xf32>
    %cst_24 = arith.constant dense<0xFF800000> : vector<8xf32>
    %67 = vector.multi_reduction <maximumf>, %66, %cst_24 [1] : vector<8x8xf32> to vector<8xf32>
    %68 = vector.shape_cast %67 : vector<8xf32> to vector<8x1xf32>
    %69 = vector.broadcast %68 : vector<8x1xf32> to vector<8x8xf32>
    %70 = arith.subf %66, %69 : vector<8x8xf32>
    %71 = math.exp %70 : vector<8x8xf32>
    %cst_25 = arith.constant dense<0.000000e+00> : vector<8xf32>
    %72 = vector.multi_reduction <add>, %71, %cst_25 [1] : vector<8x8xf32> to vector<8xf32>
    %73 = vector.shape_cast %72 : vector<8xf32> to vector<8x1xf32>
    %74 = vector.broadcast %73 : vector<8x1xf32> to vector<8x8xf32>
    %75 = arith.divf %71, %74 : vector<8x8xf32>
    %cst_26 = arith.constant dense<0.000000e+00> : vector<8x64xf32>
    %76 = tpu.matmul %75, %64, %cst_26 {dimension_numbers = #tpu.dot_dimension_numbers<[1], [0], [0], [1], [0, 0, 1, 1], [], []>} : vector<8x8xf32>, vector<8x64xf32>, vector<8x64xf32> -> vector<8x64xf32>
    %77 = vector.extract_strided_slice %3 {offsets = [0, 320], sizes = [8, 64], strides = [1, 1]} : vector<8x1024xf32> to vector<8x64xf32>
    %78 = vector.extract_strided_slice %3 {offsets = [0, 832], sizes = [8, 64], strides = [1, 1]} : vector<8x1024xf32> to vector<8x64xf32>
    %79 = vector.extract_strided_slice %6 {offsets = [320, 0], sizes = [64, 8], strides = [1, 1]} : vector<512x8xf32> to vector<64x8xf32>
    %cst_27 = arith.constant dense<0.000000e+00> : vector<8x8xf32>
    %80 = tpu.matmul %77, %79, %cst_27 {dimension_numbers = #tpu.dot_dimension_numbers<[1], [0], [0], [1], [0, 0, 1, 1], [], []>} : vector<8x64xf32>, vector<64x8xf32>, vector<8x8xf32> -> vector<8x8xf32>
    %cst_28 = arith.constant dense<0xFF800000> : vector<8xf32>
    %81 = vector.multi_reduction <maximumf>, %80, %cst_28 [1] : vector<8x8xf32> to vector<8xf32>
    %82 = vector.shape_cast %81 : vector<8xf32> to vector<8x1xf32>
    %83 = vector.broadcast %82 : vector<8x1xf32> to vector<8x8xf32>
    %84 = arith.subf %80, %83 : vector<8x8xf32>
    %85 = math.exp %84 : vector<8x8xf32>
    %cst_29 = arith.constant dense<0.000000e+00> : vector<8xf32>
    %86 = vector.multi_reduction <add>, %85, %cst_29 [1] : vector<8x8xf32> to vector<8xf32>
    %87 = vector.shape_cast %86 : vector<8xf32> to vector<8x1xf32>
    %88 = vector.broadcast %87 : vector<8x1xf32> to vector<8x8xf32>
    %89 = arith.divf %85, %88 : vector<8x8xf32>
    %cst_30 = arith.constant dense<0.000000e+00> : vector<8x64xf32>
    %90 = tpu.matmul %89, %78, %cst_30 {dimension_numbers = #tpu.dot_dimension_numbers<[1], [0], [0], [1], [0, 0, 1, 1], [], []>} : vector<8x8xf32>, vector<8x64xf32>, vector<8x64xf32> -> vector<8x64xf32>
    %91 = vector.extract_strided_slice %3 {offsets = [0, 384], sizes = [8, 64], strides = [1, 1]} : vector<8x1024xf32> to vector<8x64xf32>
    %92 = vector.extract_strided_slice %3 {offsets = [0, 896], sizes = [8, 64], strides = [1, 1]} : vector<8x1024xf32> to vector<8x64xf32>
    %93 = vector.extract_strided_slice %6 {offsets = [384, 0], sizes = [64, 8], strides = [1, 1]} : vector<512x8xf32> to vector<64x8xf32>
    %cst_31 = arith.constant dense<0.000000e+00> : vector<8x8xf32>
    %94 = tpu.matmul %91, %93, %cst_31 {dimension_numbers = #tpu.dot_dimension_numbers<[1], [0], [0], [1], [0, 0, 1, 1], [], []>} : vector<8x64xf32>, vector<64x8xf32>, vector<8x8xf32> -> vector<8x8xf32>
    %cst_32 = arith.constant dense<0xFF800000> : vector<8xf32>
    %95 = vector.multi_reduction <maximumf>, %94, %cst_32 [1] : vector<8x8xf32> to vector<8xf32>
    %96 = vector.shape_cast %95 : vector<8xf32> to vector<8x1xf32>
    %97 = vector.broadcast %96 : vector<8x1xf32> to vector<8x8xf32>
    %98 = arith.subf %94, %97 : vector<8x8xf32>
    %99 = math.exp %98 : vector<8x8xf32>
    %cst_33 = arith.constant dense<0.000000e+00> : vector<8xf32>
    %100 = vector.multi_reduction <add>, %99, %cst_33 [1] : vector<8x8xf32> to vector<8xf32>
    %101 = vector.shape_cast %100 : vector<8xf32> to vector<8x1xf32>
    %102 = vector.broadcast %101 : vector<8x1xf32> to vector<8x8xf32>
    %103 = arith.divf %99, %102 : vector<8x8xf32>
    %cst_34 = arith.constant dense<0.000000e+00> : vector<8x64xf32>
    %104 = tpu.matmul %103, %92, %cst_34 {dimension_numbers = #tpu.dot_dimension_numbers<[1], [0], [0], [1], [0, 0, 1, 1], [], []>} : vector<8x8xf32>, vector<8x64xf32>, vector<8x64xf32> -> vector<8x64xf32>
    %105 = vector.extract_strided_slice %3 {offsets = [0, 448], sizes = [8, 64], strides = [1, 1]} : vector<8x1024xf32> to vector<8x64xf32>
    %106 = vector.extract_strided_slice %3 {offsets = [0, 960], sizes = [8, 64], strides = [1, 1]} : vector<8x1024xf32> to vector<8x64xf32>
    %107 = vector.extract_strided_slice %6 {offsets = [448, 0], sizes = [64, 8], strides = [1, 1]} : vector<512x8xf32> to vector<64x8xf32>
    %cst_35 = arith.constant dense<0.000000e+00> : vector<8x8xf32>
    %108 = tpu.matmul %105, %107, %cst_35 {dimension_numbers = #tpu.dot_dimension_numbers<[1], [0], [0], [1], [0, 0, 1, 1], [], []>} : vector<8x64xf32>, vector<64x8xf32>, vector<8x8xf32> -> vector<8x8xf32>
    %cst_36 = arith.constant dense<0xFF800000> : vector<8xf32>
    %109 = vector.multi_reduction <maximumf>, %108, %cst_36 [1] : vector<8x8xf32> to vector<8xf32>
    %110 = vector.shape_cast %109 : vector<8xf32> to vector<8x1xf32>
    %111 = vector.broadcast %110 : vector<8x1xf32> to vector<8x8xf32>
    %112 = arith.subf %108, %111 : vector<8x8xf32>
    %113 = math.exp %112 : vector<8x8xf32>
    %cst_37 = arith.constant dense<0.000000e+00> : vector<8xf32>
    %114 = vector.multi_reduction <add>, %113, %cst_37 [1] : vector<8x8xf32> to vector<8xf32>
    %115 = vector.shape_cast %114 : vector<8xf32> to vector<8x1xf32>
    %116 = vector.broadcast %115 : vector<8x1xf32> to vector<8x8xf32>
    %117 = arith.divf %113, %116 : vector<8x8xf32>
    %cst_38 = arith.constant dense<0.000000e+00> : vector<8x64xf32>
    %118 = tpu.matmul %117, %106, %cst_38 {dimension_numbers = #tpu.dot_dimension_numbers<[1], [0], [0], [1], [0, 0, 1, 1], [], []>} : vector<8x8xf32>, vector<8x64xf32>, vector<8x64xf32> -> vector<8x64xf32>
    %119 = tpu.concatenate %20, %34, %48, %62, %76, %90, %104, %118 in 1 : vector<8x64xf32>, vector<8x64xf32>, vector<8x64xf32>, vector<8x64xf32>, vector<8x64xf32>, vector<8x64xf32>, vector<8x64xf32>, vector<8x64xf32> -> vector<8x512xf32>
    %c0_39 = arith.constant 0 : index
    %c0_40 = arith.constant 0 : index
    %120 = vector.load %arg4[%c0_39, %c0_40] : memref<512x64xf32, #tpu.memory_space<vmem>>, vector<512x64xf32>
    %cst_41 = arith.constant dense<0.000000e+00> : vector<8x64xf32>
    %121 = tpu.matmul %119, %120, %cst_41 {dimension_numbers = #tpu.dot_dimension_numbers<[1], [0], [0], [1], [0, 0, 1, 1], [], []>} : vector<8x512xf32>, vector<512x64xf32>, vector<8x64xf32> -> vector<8x64xf32>
    %c0_42 = arith.constant 0 : index
    %c0_43 = arith.constant 0 : index
    %122 = vector.load %arg5[%c0_42, %c0_43] : memref<1x64xf32, #tpu.memory_space<vmem>>, vector<1x64xf32>
    %123 = vector.broadcast %122 : vector<1x64xf32> to vector<8x64xf32>
    %124 = arith.addf %121, %123 : vector<8x64xf32>
    %c0_44 = arith.constant 0 : index
    %c0_45 = arith.constant 0 : index
    %c0_46 = arith.constant 0 : index
    %125 = vector.load %arg6[%c0_44, %c0_45, %c0_46] : memref<1x8x64xf32, #tpu.memory_space<vmem>>, vector<1x8x64xf32>
    %126 = vector.shape_cast %125 : vector<1x8x64xf32> to vector<8x64xf32>
    %127 = vector.shape_cast %124 : vector<8x64xf32> to vector<1x8x64xf32>
    tpu.vector_store %arg6[%c0_44, %c0_45, %c0_46], %127 {strides = array<i32>} : memref<1x8x64xf32, #tpu.memory_space<vmem>>, vector<1x8x64xf32>,
    return
  }
  func.func @transform_0(%arg0: i32) -> (i32, i32, i32) {
    %c0_i32 = arith.constant 0 : i32
    %c0_i32_0 = arith.constant 0 : i32
    %c0_i32_1 = arith.constant 0 : i32
    return %arg0, %c0_i32, %c0_i32_0 : i32, i32, i32
  }
  func.func @transform_1(%arg0: i32) -> (i32, i32) {
    %c0_i32 = arith.constant 0 : i32
    %c0_i32_0 = arith.constant 0 : i32
    %c0_i32_1 = arith.constant 0 : i32
    return %c0_i32, %c0_i32_0 : i32, i32
  }
  func.func @transform_2(%arg0: i32) -> (i32, i32) {
    %c0_i32 = arith.constant 0 : i32
    %c0_i32_0 = arith.constant 0 : i32
    %c0_i32_1 = arith.constant 0 : i32
    return %c0_i32, %c0_i32_0 : i32, i32
  }
  func.func @transform_3(%arg0: i32) -> (i32, i32) {
    %c0_i32 = arith.constant 0 : i32
    %c0_i32_0 = arith.constant 0 : i32
    %c0_i32_1 = arith.constant 0 : i32
    return %c0_i32, %c0_i32_0 : i32, i32
  }
  func.func @transform_4(%arg0: i32) -> (i32, i32) {
    %c0_i32 = arith.constant 0 : i32
    %c0_i32_0 = arith.constant 0 : i32
    %c0_i32_1 = arith.constant 0 : i32
    return %c0_i32, %c0_i32_0 : i32, i32
  }
  func.func @transform_5(%arg0: i32) -> (i32, i32, i32) {
    %c0_i32 = arith.constant 0 : i32
    %c0_i32_0 = arith.constant 0 : i32
    %c0_i32_1 = arith.constant 0 : i32
    return %arg0, %c0_i32, %c0_i32_0 : i32, i32, i32
  }
}

</mosaic_0001>

<llo_original>
// kernel: tpu_custom_call.1
$region0: #{tpu_custom_call.1}
  #allocation0 [shape = 'u32[]', space=smem, size = 0x4, offset = 0x4, fixed_abs, tag = 'smem constant byte address 0x4 - core index']
  #allocation1 [shape = 'u32[144,128]{1,0:T(1,128)}', space=vmem, size = 0x12000, scoped, tag = 'internal scratch']
  %s0 = inlined_call_operand.vmem [shape: f32[4,8,64], index: 0, kind: input, shape index: {}]
  %s1 = inlined_call_operand.vmem [shape: f32[64,1024], index: 1, kind: input, shape index: {}]
  %s2 = inlined_call_operand.vmem [shape: f32[512,64], index: 2, kind: input, shape index: {}]
  %s3 = inlined_call_operand.vmem [shape: f32[512,64], index: 3, kind: input, shape index: {}]
  %s4 = inlined_call_operand.vmem [shape: f32[1,64], index: 4, kind: input, shape index: {}]
  %s5 = inlined_call_operand.hbm [shape: f32[4,8,64], index: 5, kind: output, shape index: {}]
  %s6 = sld [smem:[#allocation0]]
  $region53: #{tpu_custom_call.1} parent=0
    _
  %s8 = ssub.s32 1, %s6
  %s9 = scalar_select 0, %s8, %s6
  $region1: #{tpu_custom_call.1} parent=0
    #allocation2 [shape = 'u8[8192]{0}', space=vmem, size = 0x2000, scoped, tag = 'output window, operand 0']
    #allocation3 [shape = 's32[2]{0}', space=sflag, size = 0x8, scoped, tag = 'scoped memory for tpu_custom_call.1']
    %10 = vsyncpa [#allocation3], 0
    %s11 = scalar_lea.sflag [#allocation3], 1
    %12 = vsyncpa %s11, 0
    loop: start=0, step=1, limit=6
    $region2: #{tpu_custom_call.1} parent=1 // loop_pre_header
      _
    $region3: #{tpu_custom_call.1} parent=1 // loop_header
      %s14 = sphi 0, %s18
      %p15 = scmp.ge.s32.totalorder %s14, 6
      %s24 = sphi 0, %s26
      %s27 = sphi 0, %s24
      %s28 = sphi 0, %s27
      %s44 = sphi 0, %s28
      %s48 = sphi 0, %s48
      %s50 = sphi 0, %s48
      %s51 = sphi 0, %s50
      %s65 = sphi 0, %s51
      %s69 = sphi 0, %s69
      %s71 = sphi 0, %s69
      %s72 = sphi 0, %s71
      %s86 = sphi 0, %s72
      %s90 = sphi 0, %s90
      %s92 = sphi 0, %s90
      %s93 = sphi 0, %s92
      %s107 = sphi 0, %s93
      %s111 = sphi 0, %s111
      %s113 = sphi 0, %s111
      %s114 = sphi 0, %s113
      %s128 = sphi 0, %s114
      %s134 = sphi 0, %s136
      %s137 = sphi 0, %s134
      %s138 = sphi 0, %s137
      %s154 = sphi 0, %s138
    $region4: #{tpu_custom_call.1} parent=1 // loop_header_branch
      %17 = sbr.rel (%p15) target = $region8
    $region5: #{tpu_custom_call.1} parent=1 // loop_body
      %s19 = ssub.s32 %s14, 1
      %s20 = ssub.s32 %s14, 2
      %s21 = sadd.s32 %s14, 1
      %s22 = ssub.s32 %s14, %s21
      %p23 = scmp.eq.s32.totalorder %s22, 0
      %s25 = sadd.s32 %s24, 1
      %s26 = scalar_select %p23, %s24, %s25
      %p29 = pneg %p23
      %p30 = scmp.eq.s32.totalorder %s14, 3
      %p31 = por %p29, %p30
      %p32 = scmp.ne.s32.totalorder %s24, %s27
      %p33 = scmp.eq.s32.totalorder %s14, 0
      %p34 = por %p32, %p33
      %p35 = scmp.ne.s32.totalorder %s24, %s27
      %p36 = scmp.eq.s32.totalorder %s19, 3
      %p37 = por %p35, %p36
      %p38 = scmp.ne.s32.totalorder %s27, %s28
      %p39 = scmp.eq.s32.totalorder %s19, 0
      %p40 = por %p38, %p39
      %p41 = scmp.ne.s32.totalorder %s27, %s28
      %p42 = scmp.eq.s32.totalorder %s20, 3
      %p43 = por %p41, %p42
      %p45 = scmp.ne.s32.totalorder %s28, %s44
      %p46 = scmp.eq.s32.totalorder %s20, 0
      %p47 = por %p45, %p46
      %s49 = sadd.s32 %s48, 1
      %p52 = scmp.eq.s32.totalorder %s14, 3
      %p53 = scmp.ne.s32.totalorder %s48, %s50
      %p54 = scmp.eq.s32.totalorder %s14, 0
      %p55 = por %p53, %p54
      %p56 = scmp.ne.s32.totalorder %s48, %s50
      %p57 = scmp.eq.s32.totalorder %s19, 3
      %p58 = por %p56, %p57
      %p59 = scmp.ne.s32.totalorder %s50, %s51
      %p60 = scmp.eq.s32.totalorder %s19, 0
      %p61 = por %p59, %p60
      %p62 = scmp.ne.s32.totalorder %s50, %s51
      %p63 = scmp.eq.s32.totalorder %s20, 3
      %p64 = por %p62, %p63
      %p66 = scmp.ne.s32.totalorder %s51, %s65
      %p67 = scmp.eq.s32.totalorder %s20, 0
      %p68 = por %p66, %p67
      %s70 = sadd.s32 %s69, 1
      %p73 = scmp.eq.s32.totalorder %s14, 3
      %p74 = scmp.ne.s32.totalorder %s69, %s71
      %p75 = scmp.eq.s32.totalorder %s14, 0
      %p76 = por %p74, %p75
      %p77 = scmp.ne.s32.totalorder %s69, %s71
      %p78 = scmp.eq.s32.totalorder %s19, 3
      %p79 = por %p77, %p78
      %p80 = scmp.ne.s32.totalorder %s71, %s72
      %p81 = scmp.eq.s32.totalorder %s19, 0
      %p82 = por %p80, %p81
      %p83 = scmp.ne.s32.totalorder %s71, %s72
      %p84 = scmp.eq.s32.totalorder %s20, 3
      %p85 = por %p83, %p84
      %p87 = scmp.ne.s32.totalorder %s72, %s86
      %p88 = scmp.eq.s32.totalorder %s20, 0
      %p89 = por %p87, %p88
      %s91 = sadd.s32 %s90, 1
      %p94 = scmp.eq.s32.totalorder %s14, 3
      %p95 = scmp.ne.s32.totalorder %s90, %s92
      %p96 = scmp.eq.s32.totalorder %s14, 0
      %p97 = por %p95, %p96
      %p98 = scmp.ne.s32.totalorder %s90, %s92
      %p99 = scmp.eq.s32.totalorder %s19, 3
      %p100 = por %p98, %p99
      %p101 = scmp.ne.s32.totalorder %s92, %s93
      %p102 = scmp.eq.s32.totalorder %s19, 0
      %p103 = por %p101, %p102
      %p104 = scmp.ne.s32.totalorder %s92, %s93
      %p105 = scmp.eq.s32.totalorder %s20, 3
      %p106 = por %p104, %p105
      %p108 = scmp.ne.s32.totalorder %s93, %s107
      %p109 = scmp.eq.s32.totalorder %s20, 0
      %p110 = por %p108, %p109
      %s112 = sadd.s32 %s111, 1
      %p115 = scmp.eq.s32.totalorder %s14, 3
      %p116 = scmp.ne.s32.totalorder %s111, %s113
      %p117 = scmp.eq.s32.totalorder %s14, 0
      %p118 = por %p116, %p117
      %p119 = scmp.ne.s32.totalorder %s111, %s113
      %p120 = scmp.eq.s32.totalorder %s19, 3
      %p121 = por %p119, %p120
      %p122 = scmp.ne.s32.totalorder %s113, %s114
      %p123 = scmp.eq.s32.totalorder %s19, 0
      %p124 = por %p122, %p123
      %p125 = scmp.ne.s32.totalorder %s113, %s114
      %p126 = scmp.eq.s32.totalorder %s20, 3
      %p127 = por %p125, %p126
      %p129 = scmp.ne.s32.totalorder %s114, %s128
      %p130 = scmp.eq.s32.totalorder %s20, 0
      %p131 = por %p129, %p130
      %s132 = ssub.s32 %s14, %s21
      %p133 = scmp.eq.s32.totalorder %s132, 0
      %s135 = sadd.s32 %s134, 1
      %s136 = scalar_select %p133, %s134, %s135
      %p139 = pneg %p133
      %p140 = scmp.eq.s32.totalorder %s14, 3
      %p141 = por %p139, %p140
      %p142 = scmp.ne.s32.totalorder %s134, %s137
      %p143 = scmp.eq.s32.totalorder %s14, 0
      %p144 = por %p142, %p143
      %p145 = scmp.ne.s32.totalorder %s134, %s137
      %p146 = scmp.eq.s32.totalorder %s19, 3
      %p147 = por %p145, %p146
      %p148 = scmp.ne.s32.totalorder %s137, %s138
      %p149 = scmp.eq.s32.totalorder %s19, 0
      %p150 = por %p148, %p149
      %p151 = scmp.ne.s32.totalorder %s137, %s138
      %p152 = scmp.eq.s32.totalorder %s20, 3
      %p153 = por %p151, %p152
      %p155 = scmp.ne.s32.totalorder %s138, %s154
      %p156 = scmp.eq.s32.totalorder %s20, 0
      %p157 = por %p155, %p156
      %p158 = scmp.le.s32.totalorder 1, %s14
      %p159 = scmp.lt.s32.totalorder %s14, 5
      %p160 = pnand %p158, %p159
      %p161 = pneg %p160
      // Predicated region
      $region9: #{tpu_custom_call.1} parent=5 // pred_check
        _
      $region10: #{tpu_custom_call.1} parent=5 // pred_check_branch
        %163 = sbr.rel (%p160) target = $region12
      $region11: #{tpu_custom_call.1} parent=5 // pred_region
        %s164 = ssub.s32 %s14, 1
        // Predicated region
        $region13: #{tpu_custom_call.1} parent=11 // pred_check
          %p165 = pneg %p61
        $region14: #{tpu_custom_call.1} parent=11 // pred_check_branch
          %167 = sbr.rel (%p165) target = $region16
        $region15: #{tpu_custom_call.1} parent=11 // pred_region
          _
        $region16: #{tpu_custom_call.1} parent=11 // pred_fallthru
          _
        // Predicated region
        $region17: #{tpu_custom_call.1} parent=11 // pred_check
          %p168 = pneg %p82
        $region18: #{tpu_custom_call.1} parent=11 // pred_check_branch
          %170 = sbr.rel (%p168) target = $region20
        $region19: #{tpu_custom_call.1} parent=11 // pred_region
          _
        $region20: #{tpu_custom_call.1} parent=11 // pred_fallthru
          _
        // Predicated region
        $region21: #{tpu_custom_call.1} parent=11 // pred_check
          %p171 = pneg %p103
        $region22: #{tpu_custom_call.1} parent=11 // pred_check_branch
          %173 = sbr.rel (%p171) target = $region24
        $region23: #{tpu_custom_call.1} parent=11 // pred_region
          _
        $region24: #{tpu_custom_call.1} parent=11 // pred_fallthru
          _
        // Predicated region
        $region25: #{tpu_custom_call.1} parent=11 // pred_check
          %p174 = pneg %p124
        $region26: #{tpu_custom_call.1} parent=11 // pred_check_branch
          %176 = sbr.rel (%p174) target = $region28
        $region27: #{tpu_custom_call.1} parent=11 // pred_region
          _
        $region28: #{tpu_custom_call.1} parent=11 // pred_fallthru
          _
      $region12: #{tpu_custom_call.1} parent=5 // pred_fallthru
        _
      %p177 = scmp.lt.s32.totalorder %s14, 4
      // Predicated region
      $region29: #{tpu_custom_call.1} parent=5 // pred_check
        %p178 = pneg %p177
      $region30: #{tpu_custom_call.1} parent=5 // pred_check_branch
        %180 = sbr.rel (%p178) target = $region32
      $region31: #{tpu_custom_call.1} parent=5 // pred_region
        // Predicated region
        $region33: #{tpu_custom_call.1} parent=31 // pred_check
          %p181 = pneg %p34
        $region34: #{tpu_custom_call.1} parent=31 // pred_check_branch
          %183 = sbr.rel (%p181) target = $region36
        $region35: #{tpu_custom_call.1} parent=31 // pred_region
          %p184 = scmp.lt.s32.totalorder %s14, 3
          %s185 = scalar_select %p184, %s14, 3
          %s186 = smul.addr %s185, 8
          %s187 = scalar_lea.vmem %s0, %s186
        $region36: #{tpu_custom_call.1} parent=31 // pred_fallthru
          _
      $region32: #{tpu_custom_call.1} parent=5 // pred_fallthru
        _
      %p188 = scmp.le.s32.totalorder 1, %s14
      %p189 = scmp.lt.s32.totalorder %s14, 5
      %p190 = pnand %p188, %p189
      %p191 = pneg %p190
      // Predicated region
      $region37: #{tpu_custom_call.1} parent=5 // pred_check
        _
      $region38: #{tpu_custom_call.1} parent=5 // pred_check_branch
        %193 = sbr.rel (%p190) target = $region40
      $region39: #{tpu_custom_call.1} parent=5 // pred_region
        %s194 = ssub.s32 %s14, 1
        %p195 = scmp.lt.s32.totalorder %s19, 3
        %s196 = scalar_select %p195, %s19, 3
        %s197 = smul.addr %s196, 8
        %s198 = scalar_lea.vmem %s0, %s197
        %p199 = pneg %p40
        %p200 = pneg %p37
        %p201 = pneg %p61
        %p202 = pneg %p58
        %p203 = pneg %p82
        %p204 = pneg %p79
        %p205 = pneg %p103
        %p206 = pneg %p100
        %p207 = pneg %p124
        %p208 = pneg %p121
        %p209 = pneg %p150
        %p210 = pneg %p147
        %s211 = sand.u32 %s137, 1
        %s212 = scalar_lea.sflag [#allocation3], %s211
        %s213 = sand.u32 %s137, 1
        %s214 = smul.addr %s213, 8
        %s215 = scalar_lea.vmem [#allocation2], %s214
        %p216 = scmp.lt.s32.totalorder %s19, 3
        %s217 = scalar_select %p216, %s19, 3
        %s218 = smul.addr %s217, 8
        %s219 = scalar_lea.vmem %s0, %s218
        %v220 = vld [vmem:[%s219] sm:$0xff]
        %v221 = vld [vmem:[%s1] sm:$0xff]
        %v222 = vld [vmem:[%s1 + $0x8] sm:$0xff]
        %v223 = vld [vmem:[%s1 + $0x10] sm:$0xff]
        %v224 = vld [vmem:[%s1 + $0x18] sm:$0xff]
        %v225 = vld [vmem:[%s1 + $0x20] sm:$0xff]
        %v226 = vld [vmem:[%s1 + $0x28] sm:$0xff]
        %v227 = vld [vmem:[%s1 + $0x30] sm:$0xff]
        %v228 = vld [vmem:[%s1 + $0x38] sm:$0xff]
        %v229 = vld [vmem:[%s1 + $0x40] sm:$0xff]
        %v230 = vld [vmem:[%s1 + $0x48] sm:$0xff]
        %v231 = vld [vmem:[%s1 + $0x50] sm:$0xff]
        %v232 = vld [vmem:[%s1 + $0x58] sm:$0xff]
        %v233 = vld [vmem:[%s1 + $0x60] sm:$0xff]
        %v234 = vld [vmem:[%s1 + $0x68] sm:$0xff]
        %v235 = vld [vmem:[%s1 + $0x70] sm:$0xff]
        %v236 = vld [vmem:[%s1 + $0x78] sm:$0xff]
        %v237 = vld [vmem:[%s1 + $0x80] sm:$0xff]
        %v238 = vld [vmem:[%s1 + $0x88] sm:$0xff]
        %v239 = vld [vmem:[%s1 + $0x90] sm:$0xff]
        %v240 = vld [vmem:[%s1 + $0x98] sm:$0xff]
        %v241 = vld [vmem:[%s1 + $0xa0] sm:$0xff]
        %v242 = vld [vmem:[%s1 + $0xa8] sm:$0xff]
        %v243 = vld [vmem:[%s1 + $0xb0] sm:$0xff]
        %v244 = vld [vmem:[%s1 + $0xb8] sm:$0xff]
        %v245 = vld [vmem:[%s1 + $0xc0] sm:$0xff]
        %v246 = vld [vmem:[%s1 + $0xc8] sm:$0xff]
        %v247 = vld [vmem:[%s1 + $0xd0] sm:$0xff]
        %v248 = vld [vmem:[%s1 + $0xd8] sm:$0xff]
        %v249 = vld [vmem:[%s1 + $0xe0] sm:$0xff]
        %v250 = vld [vmem:[%s1 + $0xe8] sm:$0xff]
        %v251 = vld [vmem:[%s1 + $0xf0] sm:$0xff]
        %v252 = vld [vmem:[%s1 + $0xf8] sm:$0xff]
        %v253 = vld [vmem:[%s1 + $0x100] sm:$0xff]
        %v254 = vld [vmem:[%s1 + $0x108] sm:$0xff]
        %v255 = vld [vmem:[%s1 + $0x110] sm:$0xff]
        %v256 = vld [vmem:[%s1 + $0x118] sm:$0xff]
        %v257 = vld [vmem:[%s1 + $0x120] sm:$0xff]
        %v258 = vld [vmem:[%s1 + $0x128] sm:$0xff]
        %v259 = vld [vmem:[%s1 + $0x130] sm:$0xff]
        %v260 = vld [vmem:[%s1 + $0x138] sm:$0xff]
        %v261 = vld [vmem:[%s1 + $0x140] sm:$0xff]
        %v262 = vld [vmem:[%s1 + $0x148] sm:$0xff]
        %v263 = vld [vmem:[%s1 + $0x150] sm:$0xff]
        %v264 = vld [vmem:[%s1 + $0x158] sm:$0xff]
        %v265 = vld [vmem:[%s1 + $0x160] sm:$0xff]
        %v266 = vld [vmem:[%s1 + $0x168] sm:$0xff]
        %v267 = vld [vmem:[%s1 + $0x170] sm:$0xff]
        %v268 = vld [vmem:[%s1 + $0x178] sm:$0xff]
        %v269 = vld [vmem:[%s1 + $0x180] sm:$0xff]
        %v270 = vld [vmem:[%s1 + $0x188] sm:$0xff]
        %v271 = vld [vmem:[%s1 + $0x190] sm:$0xff]
        %v272 = vld [vmem:[%s1 + $0x198] sm:$0xff]
        %v273 = vld [vmem:[%s1 + $0x1a0] sm:$0xff]
        %v274 = vld [vmem:[%s1 + $0x1a8] sm:$0xff]
        %v275 = vld [vmem:[%s1 + $0x1b0] sm:$0xff]
        %v276 = vld [vmem:[%s1 + $0x1b8] sm:$0xff]
        %v277 = vld [vmem:[%s1 + $0x1c0] sm:$0xff]
        %v278 = vld [vmem:[%s1 + $0x1c8] sm:$0xff]
        %v279 = vld [vmem:[%s1 + $0x1d0] sm:$0xff]
        %v280 = vld [vmem:[%s1 + $0x1d8] sm:$0xff]
        %v281 = vld [vmem:[%s1 + $0x1e0] sm:$0xff]
        %v282 = vld [vmem:[%s1 + $0x1e8] sm:$0xff]
        %v283 = vld [vmem:[%s1 + $0x1f0] sm:$0xff]
        %v284 = vld [vmem:[%s1 + $0x1f8] sm:$0xff]
        %vm285 = vcmask 523264
        %v287 = vsel %vm285, %v220, 0
        %289 = vmatprep.subr.mxu0 %v222
        %290 = vmatpush1.msra.mxu0 %v221
        %291 = vmatprep.subr.mxu0 %v230
        %292 = vmatpush1.msra.mxu0 %v229
        %293 = vmatprep.subr.mxu0 %v238
        %294 = vmatpush1.msra.mxu0 %v237
        %295 = vmatprep.subr.mxu0 %v246
        %296 = vmatpush1.msra.mxu0 %v245
        %297 = vmatprep.subr.mxu0 %v254
        %298 = vmatpush1.msra.mxu0 %v253
        %299 = vmatprep.subr.mxu0 %v262
        %300 = vmatpush1.msra.mxu0 %v261
        %301 = vmatprep.subr.mxu0 %v270
        %302 = vmatpush1.msra.mxu0 %v269
        %303 = vmatprep.subr.mxu0 %v278
        %304 = vmatpush1.msra.mxu0 %v277
        %305 = vmatprep.subr.mxu0 0.0
        %306 = vmatpush1.msra.mxu0 0.0
        %307 = vmatprep.subr.mxu0 0.0
        %308 = vmatpush1.msra.mxu0 0.0
        %309 = vmatprep.subr.mxu0 0.0
        %310 = vmatpush1.msra.mxu0 0.0
        %311 = vmatprep.subr.mxu0 0.0
        %312 = vmatpush1.msra.mxu0 0.0
        %313 = vmatprep.subr.mxu0 0.0
        %314 = vmatpush1.msra.mxu0 0.0
        %315 = vmatprep.subr.mxu0 0.0
        %316 = vmatpush1.msra.mxu0 0.0
        %317 = vmatprep.subr.mxu0 0.0
        %318 = vmatpush1.msra.mxu0 0.0
        %319 = vmatprep.subr.mxu0 0.0
        %320 = vmatpush1.msra.mxu0 0.0
        %321 = vmatprep.subr.mxu0 0.0
        %322 = vmatpush1.msra.mxu0 0.0
        %323 = vmatprep.subr.mxu0 0.0
        %324 = vmatpush1.msra.mxu0 0.0
        %325 = vmatprep.subr.mxu0 0.0
        %326 = vmatpush1.msra.mxu0 0.0
        %327 = vmatprep.subr.mxu0 0.0
        %328 = vmatpush1.msra.mxu0 0.0
        %329 = vmatprep.subr.mxu0 0.0
        %330 = vmatpush1.msra.mxu0 0.0
        %331 = vmatprep.subr.mxu0 0.0
        %332 = vmatpush1.msra.mxu0 0.0
        %333 = vmatprep.subr.mxu0 0.0
        %334 = vmatpush1.msra.mxu0 0.0
        %335 = vmatprep.subr.mxu0 0.0
        %336 = vmatpush1.msra.mxu0 0.0
        %337 = vmatprep.subr.mxu0 0.0
        %338 = vmatpush1.msra.mxu0 0.0
        %339 = vmatprep.subr.mxu0 0.0
        %340 = vmatpush1.msra.mxu0 0.0
        %341 = vmatprep.subr.mxu0 0.0
        %342 = vmatpush1.msra.mxu0 0.0
        %343 = vmatprep.subr.mxu0 0.0
        %344 = vmatpush1.msra.mxu0 0.0
        %345 = vmatprep.subr.mxu0 0.0
        %346 = vmatpush1.msra.mxu0 0.0
        %347 = vmatprep.subr.mxu0 0.0
        %348 = vmatpush1.msra.mxu0 0.0
        %349 = vmatprep.subr.mxu0 0.0
        %350 = vmatpush1.msra.mxu0 0.0
        %351 = vmatprep.subr.mxu0 0.0
        %352 = vmatpush1.msra.mxu0 0.0
        %353 = vmatprep.mubr.f32.mxu0 0.0
        %354 = vmatmul.mubr.f32.gmra.mrb[0].mxu0 %v287
        %v355 = vpop.f32.mrb[0].mxu0
        %v356 = vadd.f32 0.0, %v355
        %v357 = vpop.f32.mrb[0].mxu0
        %v358 = vadd.f32 0.0, %v357
        %359 = vdwg.mxu0
        %360 = vmatprep.subr.mxu0 %v224
        %361 = vmatpush1.msra.mxu0 %v223
        %362 = vmatprep.subr.mxu0 %v232
        %363 = vmatpush1.msra.mxu0 %v231
        %364 = vmatprep.subr.mxu0 %v240
        %365 = vmatpush1.msra.mxu0 %v239
        %366 = vmatprep.subr.mxu0 %v248
        %367 = vmatpush1.msra.mxu0 %v247
        %368 = vmatprep.subr.mxu0 %v256
        %369 = vmatpush1.msra.mxu0 %v255
        %370 = vmatprep.subr.mxu0 %v264
        %371 = vmatpush1.msra.mxu0 %v263
        %372 = vmatprep.subr.mxu0 %v272
        %373 = vmatpush1.msra.mxu0 %v271
        %374 = vmatprep.subr.mxu0 %v280
        %375 = vmatpush1.msra.mxu0 %v279
        %376 = vmatprep.subr.mxu0 0.0
        %377 = vmatpush1.msra.mxu0 0.0
        %378 = vmatprep.subr.mxu0 0.0
        %379 = vmatpush1.msra.mxu0 0.0
        %380 = vmatprep.subr.mxu0 0.0
        %381 = vmatpush1.msra.mxu0 0.0
        %382 = vmatprep.subr.mxu0 0.0
        %383 = vmatpush1.msra.mxu0 0.0
        %384 = vmatprep.subr.mxu0 0.0
        %385 = vmatpush1.msra.mxu0 0.0
        %386 = vmatprep.subr.mxu0 0.0
        %387 = vmatpush1.msra.mxu0 0.0
        %388 = vmatprep.subr.mxu0 0.0
        %389 = vmatpush1.msra.mxu0 0.0
        %390 = vmatprep.subr.mxu0 0.0
        %391 = vmatpush1.msra.mxu0 0.0
        %392 = vmatprep.subr.mxu0 0.0
        %393 = vmatpush1.msra.mxu0 0.0
        %394 = vmatprep.subr.mxu0 0.0
        %395 = vmatpush1.msra.mxu0 0.0
        %396 = vmatprep.subr.mxu0 0.0
        %397 = vmatpush1.msra.mxu0 0.0
        %398 = vmatprep.subr.mxu0 0.0
        %399 = vmatpush1.msra.mxu0 0.0
        %400 = vmatprep.subr.mxu0 0.0
        %401 = vmatpush1.msra.mxu0 0.0
        %402 = vmatprep.subr.mxu0 0.0
        %403 = vmatpush1.msra.mxu0 0.0
        %404 = vmatprep.subr.mxu0 0.0
        %405 = vmatpush1.msra.mxu0 0.0
        %406 = vmatprep.subr.mxu0 0.0
        %407 = vmatpush1.msra.mxu0 0.0
        %408 = vmatprep.subr.mxu0 0.0
        %409 = vmatpush1.msra.mxu0 0.0
        %410 = vmatprep.subr.mxu0 0.0
        %411 = vmatpush1.msra.mxu0 0.0
        %412 = vmatprep.subr.mxu0 0.0
        %413 = vmatpush1.msra.mxu0 0.0
        %414 = vmatprep.subr.mxu0 0.0
        %415 = vmatpush1.msra.mxu0 0.0
        %416 = vmatprep.subr.mxu0 0.0
        %417 = vmatpush1.msra.mxu0 0.0
        %418 = vmatprep.subr.mxu0 0.0
        %419 = vmatpush1.msra.mxu0 0.0
        %420 = vmatprep.subr.mxu0 0.0
        %421 = vmatpush1.msra.mxu0 0.0
        %422 = vmatprep.subr.mxu0 0.0
        %423 = vmatpush1.msra.mxu0 0.0
        %424 = vmatprep.mubr.f32.mxu0 0.0
        %425 = vmatmul.mubr.f32.gmra.mrb[0].mxu0 %v287
        %v426 = vpop.f32.mrb[0].mxu0
        %v427 = vadd.f32 0.0, %v426
        %v428 = vpop.f32.mrb[0].mxu0
        %v429 = vadd.f32 0.0, %v428
        %430 = vdwg.mxu0
        %431 = vmatprep.subr.mxu0 %v226
        %432 = vmatpush1.msra.mxu0 %v225
        %433 = vmatprep.subr.mxu0 %v234
        %434 = vmatpush1.msra.mxu0 %v233
        %435 = vmatprep.subr.mxu0 %v242
        %436 = vmatpush1.msra.mxu0 %v241
        %437 = vmatprep.subr.mxu0 %v250
        %438 = vmatpush1.msra.mxu0 %v249
        %439 = vmatprep.subr.mxu0 %v258
        %440 = vmatpush1.msra.mxu0 %v257
        %441 = vmatprep.subr.mxu0 %v266
        %442 = vmatpush1.msra.mxu0 %v265
        %443 = vmatprep.subr.mxu0 %v274
        %444 = vmatpush1.msra.mxu0 %v273
        %445 = vmatprep.subr.mxu0 %v282
        %446 = vmatpush1.msra.mxu0 %v281
        %447 = vmatprep.subr.mxu0 0.0
        %448 = vmatpush1.msra.mxu0 0.0
        %449 = vmatprep.subr.mxu0 0.0
        %450 = vmatpush1.msra.mxu0 0.0
        %451 = vmatprep.subr.mxu0 0.0
        %452 = vmatpush1.msra.mxu0 0.0
        %453 = vmatprep.subr.mxu0 0.0
        %454 = vmatpush1.msra.mxu0 0.0
        %455 = vmatprep.subr.mxu0 0.0
        %456 = vmatpush1.msra.mxu0 0.0
        %457 = vmatprep.subr.mxu0 0.0
        %458 = vmatpush1.msra.mxu0 0.0
        %459 = vmatprep.subr.mxu0 0.0
        %460 = vmatpush1.msra.mxu0 0.0
        %461 = vmatprep.subr.mxu0 0.0
        %462 = vmatpush1.msra.mxu0 0.0
        %463 = vmatprep.subr.mxu0 0.0
        %464 = vmatpush1.msra.mxu0 0.0
        %465 = vmatprep.subr.mxu0 0.0
        %466 = vmatpush1.msra.mxu0 0.0
        %467 = vmatprep.subr.mxu0 0.0
        %468 = vmatpush1.msra.mxu0 0.0
        %469 = vmatprep.subr.mxu0 0.0
        %470 = vmatpush1.msra.mxu0 0.0
        %471 = vmatprep.subr.mxu0 0.0
        %472 = vmatpush1.msra.mxu0 0.0
        %473 = vmatprep.subr.mxu0 0.0
        %474 = vmatpush1.msra.mxu0 0.0
        %475 = vmatprep.subr.mxu0 0.0
        %476 = vmatpush1.msra.mxu0 0.0
        %477 = vmatprep.subr.mxu0 0.0
        %478 = vmatpush1.msra.mxu0 0.0
        %479 = vmatprep.subr.mxu0 0.0
        %480 = vmatpush1.msra.mxu0 0.0
        %481 = vmatprep.subr.mxu0 0.0
        %482 = vmatpush1.msra.mxu0 0.0
        %483 = vmatprep.subr.mxu0 0.0
        %484 = vmatpush1.msra.mxu0 0.0
        %485 = vmatprep.subr.mxu0 0.0
        %486 = vmatpush1.msra.mxu0 0.0
        %487 = vmatprep.subr.mxu0 0.0
        %488 = vmatpush1.msra.mxu0 0.0
        %489 = vmatprep.subr.mxu0 0.0
        %490 = vmatpush1.msra.mxu0 0.0
        %491 = vmatprep.subr.mxu0 0.0
        %492 = vmatpush1.msra.mxu0 0.0
        %493 = vmatprep.subr.mxu0 0.0
        %494 = vmatpush1.msra.mxu0 0.0
        %495 = vmatprep.mubr.f32.mxu0 0.0
        %496 = vmatmul.mubr.f32.gmra.mrb[0].mxu0 %v287
        %v497 = vpop.f32.mrb[0].mxu0
        %v498 = vadd.f32 0.0, %v497
        %v499 = vpop.f32.mrb[0].mxu0
        %v500 = vadd.f32 0.0, %v499
        %501 = vdwg.mxu0
        %502 = vmatprep.subr.mxu0 %v228
        %503 = vmatpush1.msra.mxu0 %v227
        %504 = vmatprep.subr.mxu0 %v236
        %505 = vmatpush1.msra.mxu0 %v235
        %506 = vmatprep.subr.mxu0 %v244
        %507 = vmatpush1.msra.mxu0 %v243
        %508 = vmatprep.subr.mxu0 %v252
        %509 = vmatpush1.msra.mxu0 %v251
        %510 = vmatprep.subr.mxu0 %v260
        %511 = vmatpush1.msra.mxu0 %v259
        %512 = vmatprep.subr.mxu0 %v268
        %513 = vmatpush1.msra.mxu0 %v267
        %514 = vmatprep.subr.mxu0 %v276
        %515 = vmatpush1.msra.mxu0 %v275
        %516 = vmatprep.subr.mxu0 %v284
        %517 = vmatpush1.msra.mxu0 %v283
        %518 = vmatprep.subr.mxu0 0.0
        %519 = vmatpush1.msra.mxu0 0.0
        %520 = vmatprep.subr.mxu0 0.0
        %521 = vmatpush1.msra.mxu0 0.0
        %522 = vmatprep.subr.mxu0 0.0
        %523 = vmatpush1.msra.mxu0 0.0
        %524 = vmatprep.subr.mxu0 0.0
        %525 = vmatpush1.msra.mxu0 0.0
        %526 = vmatprep.subr.mxu0 0.0
        %527 = vmatpush1.msra.mxu0 0.0
        %528 = vmatprep.subr.mxu0 0.0
        %529 = vmatpush1.msra.mxu0 0.0
        %530 = vmatprep.subr.mxu0 0.0
        %531 = vmatpush1.msra.mxu0 0.0
        %532 = vmatprep.subr.mxu0 0.0
        %533 = vmatpush1.msra.mxu0 0.0
        %534 = vmatprep.subr.mxu0 0.0
        %535 = vmatpush1.msra.mxu0 0.0
        %536 = vmatprep.subr.mxu0 0.0
        %537 = vmatpush1.msra.mxu0 0.0
        %538 = vmatprep.subr.mxu0 0.0
        %539 = vmatpush1.msra.mxu0 0.0
        %540 = vmatprep.subr.mxu0 0.0
        %541 = vmatpush1.msra.mxu0 0.0
        %542 = vmatprep.subr.mxu0 0.0
        %543 = vmatpush1.msra.mxu0 0.0
        %544 = vmatprep.subr.mxu0 0.0
        %545 = vmatpush1.msra.mxu0 0.0
        %546 = vmatprep.subr.mxu0 0.0
        %547 = vmatpush1.msra.mxu0 0.0
        %548 = vmatprep.subr.mxu0 0.0
        %549 = vmatpush1.msra.mxu0 0.0
        %550 = vmatprep.subr.mxu0 0.0
        %551 = vmatpush1.msra.mxu0 0.0
        %552 = vmatprep.subr.mxu0 0.0
        %553 = vmatpush1.msra.mxu0 0.0
        %554 = vmatprep.subr.mxu0 0.0
        %555 = vmatpush1.msra.mxu0 0.0
        %556 = vmatprep.subr.mxu0 0.0
        %557 = vmatpush1.msra.mxu0 0.0
        %558 = vmatprep.subr.mxu0 0.0
        %559 = vmatpush1.msra.mxu0 0.0
        %560 = vmatprep.subr.mxu0 0.0
        %561 = vmatpush1.msra.mxu0 0.0
        %562 = vmatprep.subr.mxu0 0.0
        %563 = vmatpush1.msra.mxu0 0.0
        %564 = vmatprep.subr.mxu0 0.0
        %565 = vmatpush1.msra.mxu0 0.0
        %566 = vmatprep.mubr.f32.mxu0 0.0
        %567 = vmatmul.mubr.f32.gmra.mrb[0].mxu0 %v287
        %v568 = vpop.f32.mrb[0].mxu0
        %v569 = vadd.f32 0.0, %v568
        %v570 = vpop.f32.mrb[0].mxu0
        %v571 = vadd.f32 0.0, %v570
        %572 = vdwg.mxu0
        %v573 = vld [vmem:[%s2] sm:$0xff]
        %v574 = vld [vmem:[%s2 + $0x8] sm:$0xff]
        %v575 = vld [vmem:[%s2 + $0x10] sm:$0xff]
        %v576 = vld [vmem:[%s2 + $0x18] sm:$0xff]
        %v577 = vld [vmem:[%s2 + $0x20] sm:$0xff]
        %v578 = vld [vmem:[%s2 + $0x28] sm:$0xff]
        %v579 = vld [vmem:[%s2 + $0x30] sm:$0xff]
        %v580 = vld [vmem:[%s2 + $0x38] sm:$0xff]
        %v581 = vld [vmem:[%s2 + $0x40] sm:$0xff]
        %v582 = vld [vmem:[%s2 + $0x48] sm:$0xff]
        %v583 = vld [vmem:[%s2 + $0x50] sm:$0xff]
        %v584 = vld [vmem:[%s2 + $0x58] sm:$0xff]
        %v585 = vld [vmem:[%s2 + $0x60] sm:$0xff]
        %v586 = vld [vmem:[%s2 + $0x68] sm:$0xff]
        %v587 = vld [vmem:[%s2 + $0x70] sm:$0xff]
        %v588 = vld [vmem:[%s2 + $0x78] sm:$0xff]
        %v589 = vld [vmem:[%s2 + $0x80] sm:$0xff]
        %v590 = vld [vmem:[%s2 + $0x88] sm:$0xff]
        %v591 = vld [vmem:[%s2 + $0x90] sm:$0xff]
        %v592 = vld [vmem:[%s2 + $0x98] sm:$0xff]
        %v593 = vld [vmem:[%s2 + $0xa0] sm:$0xff]
        %v594 = vld [vmem:[%s2 + $0xa8] sm:$0xff]
        %v595 = vld [vmem:[%s2 + $0xb0] sm:$0xff]
        %v596 = vld [vmem:[%s2 + $0xb8] sm:$0xff]
        %v597 = vld [vmem:[%s2 + $0xc0] sm:$0xff]
        %v598 = vld [vmem:[%s2 + $0xc8] sm:$0xff]
        %v599 = vld [vmem:[%s2 + $0xd0] sm:$0xff]
        %v600 = vld [vmem:[%s2 + $0xd8] sm:$0xff]
        %v601 = vld [vmem:[%s2 + $0xe0] sm:$0xff]
        %v602 = vld [vmem:[%s2 + $0xe8] sm:$0xff]
        %v603 = vld [vmem:[%s2 + $0xf0] sm:$0xff]
        %v604 = vld [vmem:[%s2 + $0xf8] sm:$0xff]
        %v605 = vld [vmem:[%s2 + $0x100] sm:$0xff]
        %v606 = vld [vmem:[%s2 + $0x108] sm:$0xff]
        %v607 = vld [vmem:[%s2 + $0x110] sm:$0xff]
        %v608 = vld [vmem:[%s2 + $0x118] sm:$0xff]
        %v609 = vld [vmem:[%s2 + $0x120] sm:$0xff]
        %v610 = vld [vmem:[%s2 + $0x128] sm:$0xff]
        %v611 = vld [vmem:[%s2 + $0x130] sm:$0xff]
        %v612 = vld [vmem:[%s2 + $0x138] sm:$0xff]
        %v613 = vld [vmem:[%s2 + $0x140] sm:$0xff]
        %v614 = vld [vmem:[%s2 + $0x148] sm:$0xff]
        %v615 = vld [vmem:[%s2 + $0x150] sm:$0xff]
        %v616 = vld [vmem:[%s2 + $0x158] sm:$0xff]
        %v617 = vld [vmem:[%s2 + $0x160] sm:$0xff]
        %v618 = vld [vmem:[%s2 + $0x168] sm:$0xff]
        %v619 = vld [vmem:[%s2 + $0x170] sm:$0xff]
        %v620 = vld [vmem:[%s2 + $0x178] sm:$0xff]
        %v621 = vld [vmem:[%s2 + $0x180] sm:$0xff]
        %v622 = vld [vmem:[%s2 + $0x188] sm:$0xff]
        %v623 = vld [vmem:[%s2 + $0x190] sm:$0xff]
        %v624 = vld [vmem:[%s2 + $0x198] sm:$0xff]
        %v625 = vld [vmem:[%s2 + $0x1a0] sm:$0xff]
        %v626 = vld [vmem:[%s2 + $0x1a8] sm:$0xff]
        %v627 = vld [vmem:[%s2 + $0x1b0] sm:$0xff]
        %v628 = vld [vmem:[%s2 + $0x1b8] sm:$0xff]
        %v629 = vld [vmem:[%s2 + $0x1c0] sm:$0xff]
        %v630 = vld [vmem:[%s2 + $0x1c8] sm:$0xff]
        %v631 = vld [vmem:[%s2 + $0x1d0] sm:$0xff]
        %v632 = vld [vmem:[%s2 + $0x1d8] sm:$0xff]
        %v633 = vld [vmem:[%s2 + $0x1e0] sm:$0xff]
        %v634 = vld [vmem:[%s2 + $0x1e8] sm:$0xff]
        %v635 = vld [vmem:[%s2 + $0x1f0] sm:$0xff]
        %v636 = vld [vmem:[%s2 + $0x1f8] sm:$0xff]
        %v638 = vsel %vm285, %v573, 0
        %v641 = vsel %vm285, %v574, 0
        %v644 = vsel %vm285, %v575, 0
        %v647 = vsel %vm285, %v576, 0
        %v650 = vsel %vm285, %v577, 0
        %v653 = vsel %vm285, %v578, 0
        %v656 = vsel %vm285, %v579, 0
        %v659 = vsel %vm285, %v580, 0
        %v662 = vsel %vm285, %v581, 0
        %v665 = vsel %vm285, %v582, 0
        %v668 = vsel %vm285, %v583, 0
        %v671 = vsel %vm285, %v584, 0
        %v674 = vsel %vm285, %v585, 0
        %v677 = vsel %vm285, %v586, 0
        %v680 = vsel %vm285, %v587, 0
        %v683 = vsel %vm285, %v588, 0
        %v686 = vsel %vm285, %v589, 0
        %v689 = vsel %vm285, %v590, 0
        %v692 = vsel %vm285, %v591, 0
        %v695 = vsel %vm285, %v592, 0
        %v698 = vsel %vm285, %v593, 0
        %v701 = vsel %vm285, %v594, 0
        %v704 = vsel %vm285, %v595, 0
        %v707 = vsel %vm285, %v596, 0
        %v710 = vsel %vm285, %v597, 0
        %v713 = vsel %vm285, %v598, 0
        %v716 = vsel %vm285, %v599, 0
        %v719 = vsel %vm285, %v600, 0
        %v722 = vsel %vm285, %v601, 0
        %v725 = vsel %vm285, %v602, 0
        %v728 = vsel %vm285, %v603, 0
        %v731 = vsel %vm285, %v604, 0
        %v734 = vsel %vm285, %v605, 0
        %v737 = vsel %vm285, %v606, 0
        %v740 = vsel %vm285, %v607, 0
        %v743 = vsel %vm285, %v608, 0
        %v746 = vsel %vm285, %v609, 0
        %v749 = vsel %vm285, %v610, 0
        %v752 = vsel %vm285, %v611, 0
        %v755 = vsel %vm285, %v612, 0
        %v758 = vsel %vm285, %v613, 0
        %v761 = vsel %vm285, %v614, 0
        %v764 = vsel %vm285, %v615, 0
        %v767 = vsel %vm285, %v616, 0
        %v770 = vsel %vm285, %v617, 0
        %v773 = vsel %vm285, %v618, 0
        %v776 = vsel %vm285, %v619, 0
        %v779 = vsel %vm285, %v620, 0
        %v782 = vsel %vm285, %v621, 0
        %v785 = vsel %vm285, %v622, 0
        %v788 = vsel %vm285, %v623, 0
        %v791 = vsel %vm285, %v624, 0
        %v794 = vsel %vm285, %v625, 0
        %v797 = vsel %vm285, %v626, 0
        %v800 = vsel %vm285, %v627, 0
        %v803 = vsel %vm285, %v628, 0
        %v806 = vsel %vm285, %v629, 0
        %v809 = vsel %vm285, %v630, 0
        %v812 = vsel %vm285, %v631, 0
        %v815 = vsel %vm285, %v632, 0
        %v818 = vsel %vm285, %v633, 0
        %v821 = vsel %vm285, %v634, 0
        %v824 = vsel %vm285, %v635, 0
        %v827 = vsel %vm285, %v636, 0
        %829 = vmatprep.subr.mxu0 0.0
        %830 = vmatpush1.xpose.msra.mxu0 %v287
        %831 = vmatprep.subr.mxu0 0.0
        %832 = vmatpush1.xpose.msra.mxu0 0.0
        %833 = vmatprep.subr.mxu0 0.0
        %834 = vmatpush1.xpose.msra.mxu0 0.0
        %835 = vmatprep.subr.mxu0 0.0
        %836 = vmatpush1.xpose.msra.mxu0 0.0
        %837 = vmatprep.subr.mxu0 0.0
        %838 = vmatpush1.xpose.msra.mxu0 0.0
        %839 = vmatprep.subr.mxu0 0.0
        %840 = vmatpush1.xpose.msra.mxu0 0.0
        %841 = vmatprep.subr.mxu0 0.0
        %842 = vmatpush1.xpose.msra.mxu0 0.0
        %843 = vmatprep.subr.mxu0 0.0
        %844 = vmatpush1.xpose.msra.mxu0 0.0
        %845 = vmatprep.subr.mxu0 0.0
        %846 = vmatpush1.xpose.msra.mxu0 0.0
        %847 = vmatprep.subr.mxu0 0.0
        %848 = vmatpush1.xpose.msra.mxu0 0.0
        %849 = vmatprep.subr.mxu0 0.0
        %850 = vmatpush1.xpose.msra.mxu0 0.0
        %851 = vmatprep.subr.mxu0 0.0
        %852 = vmatpush1.xpose.msra.mxu0 0.0
        %853 = vmatprep.subr.mxu0 0.0
        %854 = vmatpush1.xpose.msra.mxu0 0.0
        %855 = vmatprep.subr.mxu0 0.0
        %856 = vmatpush1.xpose.msra.mxu0 0.0
        %857 = vmatprep.subr.mxu0 0.0
        %858 = vmatpush1.xpose.msra.mxu0 0.0
        %859 = vmatprep.subr.mxu0 0.0
        %860 = vmatpush1.xpose.msra.mxu0 0.0
        %861 = vmatprep.subr.mxu0 0.0
        %862 = vmatpush1.xpose.msra.mxu0 0.0
        %863 = vmatprep.subr.mxu0 0.0
        %864 = vmatpush1.xpose.msra.mxu0 0.0
        %865 = vmatprep.subr.mxu0 0.0
        %866 = vmatpush1.xpose.msra.mxu0 0.0
        %867 = vmatprep.subr.mxu0 0.0
        %868 = vmatpush1.xpose.msra.mxu0 0.0
        %869 = vmatprep.subr.mxu0 0.0
        %870 = vmatpush1.xpose.msra.mxu0 0.0
        %871 = vmatprep.subr.mxu0 0.0
        %872 = vmatpush1.xpose.msra.mxu0 0.0
        %873 = vmatprep.subr.mxu0 0.0
        %874 = vmatpush1.xpose.msra.mxu0 0.0
        %875 = vmatprep.subr.mxu0 0.0
        %876 = vmatpush1.xpose.msra.mxu0 0.0
        %877 = vmatprep.subr.mxu0 0.0
        %878 = vmatpush1.xpose.msra.mxu0 0.0
        %879 = vmatprep.subr.mxu0 0.0
        %880 = vmatpush1.xpose.msra.mxu0 0.0
        %881 = vmatprep.subr.mxu0 0.0
        %882 = vmatpush1.xpose.msra.mxu0 0.0
        %883 = vmatprep.subr.mxu0 0.0
        %884 = vmatpush1.xpose.msra.mxu0 0.0
        %885 = vmatprep.subr.mxu0 0.0
        %886 = vmatpush1.xpose.msra.mxu0 0.0
        %887 = vmatprep.subr.mxu0 0.0
        %888 = vmatpush1.xpose.msra.mxu0 0.0
        %889 = vmatprep.subr.mxu0 0.0
        %890 = vmatpush1.xpose.msra.mxu0 0.0
        %891 = vmatprep.subr.mxu0 0.0
        %892 = vmatpush1.xpose.msra.mxu0 0.0
        %893 = vmatprep.mubr.f32.mxu0 0.0
        %894 = vmatmul.mubr.f32.gmra.mrb[0].mxu0 %v638
        %v895 = vpop.f32.mrb[0].mxu0
        %v896 = vadd.f32 0.0, %v895
        %v897 = vpop.f32.mrb[0].mxu0
        %898 = vmatprep.mubr.f32.mxu0 0.0
        %899 = vmatmul.mubr.f32.gmra.mrb[0].mxu0 %v641
        %v900 = vpop.f32.mrb[0].mxu0
        %v901 = vadd.f32 0.0, %v900
        %v902 = vpop.f32.mrb[0].mxu0
        %903 = vmatprep.mubr.f32.mxu0 0.0
        %904 = vmatmul.mubr.f32.gmra.mrb[0].mxu0 %v644
        %v905 = vpop.f32.mrb[0].mxu0
        %v906 = vadd.f32 0.0, %v905
        %v907 = vpop.f32.mrb[0].mxu0
        %908 = vmatprep.mubr.f32.mxu0 0.0
        %909 = vmatmul.mubr.f32.gmra.mrb[0].mxu0 %v647
        %v910 = vpop.f32.mrb[0].mxu0
        %v911 = vadd.f32 0.0, %v910
        %v912 = vpop.f32.mrb[0].mxu0
        %913 = vmatprep.mubr.f32.mxu0 0.0
        %914 = vmatmul.mubr.f32.gmra.mrb[0].mxu0 %v650
        %v915 = vpop.f32.mrb[0].mxu0
        %v916 = vadd.f32 0.0, %v915
        %v917 = vpop.f32.mrb[0].mxu0
        %918 = vmatprep.mubr.f32.mxu0 0.0
        %919 = vmatmul.mubr.f32.gmra.mrb[0].mxu0 %v653
        %v920 = vpop.f32.mrb[0].mxu0
        %v921 = vadd.f32 0.0, %v920
        %v922 = vpop.f32.mrb[0].mxu0
        %923 = vmatprep.mubr.f32.mxu0 0.0
        %924 = vmatmul.mubr.f32.gmra.mrb[0].mxu0 %v656
        %v925 = vpop.f32.mrb[0].mxu0
        %v926 = vadd.f32 0.0, %v925
        %v927 = vpop.f32.mrb[0].mxu0
        %928 = vmatprep.mubr.f32.mxu0 0.0
        %929 = vmatmul.mubr.f32.gmra.mrb[0].mxu0 %v659
        %v930 = vpop.f32.mrb[0].mxu0
        %v931 = vadd.f32 0.0, %v930
        %v932 = vpop.f32.mrb[0].mxu0
        %933 = vmatprep.mubr.f32.mxu0 0.0
        %934 = vmatmul.mubr.f32.gmra.mrb[0].mxu0 %v662
        %v935 = vpop.f32.mrb[0].mxu0
        %v936 = vadd.f32 0.0, %v935
        %v937 = vpop.f32.mrb[0].mxu0
        %938 = vmatprep.mubr.f32.mxu0 0.0
        %939 = vmatmul.mubr.f32.gmra.mrb[0].mxu0 %v665
        %v940 = vpop.f32.mrb[0].mxu0
        %v941 = vadd.f32 0.0, %v940
        %v942 = vpop.f32.mrb[0].mxu0
        %943 = vmatprep.mubr.f32.mxu0 0.0
        %944 = vmatmul.mubr.f32.gmra.mrb[0].mxu0 %v668
        %v945 = vpop.f32.mrb[0].mxu0
        %v946 = vadd.f32 0.0, %v945
        %v947 = vpop.f32.mrb[0].mxu0
        %948 = vmatprep.mubr.f32.mxu0 0.0
        %949 = vmatmul.mubr.f32.gmra.mrb[0].mxu0 %v671
        %v950 = vpop.f32.mrb[0].mxu0
        %v951 = vadd.f32 0.0, %v950
        %v952 = vpop.f32.mrb[0].mxu0
        %953 = vmatprep.mubr.f32.mxu0 0.0
        %954 = vmatmul.mubr.f32.gmra.mrb[0].mxu0 %v674
        %v955 = vpop.f32.mrb[0].mxu0
        %v956 = vadd.f32 0.0, %v955
        %v957 = vpop.f32.mrb[0].mxu0
        %958 = vmatprep.mubr.f32.mxu0 0.0
        %959 = vmatmul.mubr.f32.gmra.mrb[0].mxu0 %v677
        %v960 = vpop.f32.mrb[0].mxu0
        %v961 = vadd.f32 0.0, %v960
        %v962 = vpop.f32.mrb[0].mxu0
        %963 = vmatprep.mubr.f32.mxu0 0.0
        %964 = vmatmul.mubr.f32.gmra.mrb[0].mxu0 %v680
        %v965 = vpop.f32.mrb[0].mxu0
        %v966 = vadd.f32 0.0, %v965
        %v967 = vpop.f32.mrb[0].mxu0
        %968 = vmatprep.mubr.f32.mxu0 0.0
        %969 = vmatmul.mubr.f32.gmra.mrb[0].mxu0 %v683
        %v970 = vpop.f32.mrb[0].mxu0
        %v971 = vadd.f32 0.0, %v970
        %v972 = vpop.f32.mrb[0].mxu0
        %973 = vmatprep.mubr.f32.mxu0 0.0
        %974 = vmatmul.mubr.f32.gmra.mrb[0].mxu0 %v686
        %v975 = vpop.f32.mrb[0].mxu0
        %v976 = vadd.f32 0.0, %v975
        %v977 = vpop.f32.mrb[0].mxu0
        %978 = vmatprep.mubr.f32.mxu0 0.0
        %979 = vmatmul.mubr.f32.gmra.mrb[0].mxu0 %v689
        %v980 = vpop.f32.mrb[0].mxu0
        %v981 = vadd.f32 0.0, %v980
        %v982 = vpop.f32.mrb[0].mxu0
        %983 = vmatprep.mubr.f32.mxu0 0.0
        %984 = vmatmul.mubr.f32.gmra.mrb[0].mxu0 %v692
        %v985 = vpop.f32.mrb[0].mxu0
        %v986 = vadd.f32 0.0, %v985
        %v987 = vpop.f32.mrb[0].mxu0
        %988 = vmatprep.mubr.f32.mxu0 0.0
        %989 = vmatmul.mubr.f32.gmra.mrb[0].mxu0 %v695
        %v990 = vpop.f32.mrb[0].mxu0
        %v991 = vadd.f32 0.0, %v990
        %v992 = vpop.f32.mrb[0].mxu0
        %993 = vmatprep.mubr.f32.mxu0 0.0
        %994 = vmatmul.mubr.f32.gmra.mrb[0].mxu0 %v698
        %v995 = vpop.f32.mrb[0].mxu0
        %v996 = vadd.f32 0.0, %v995
        %v997 = vpop.f32.mrb[0].mxu0
        %998 = vmatprep.mubr.f32.mxu0 0.0
        %999 = vmatmul.mubr.f32.gmra.mrb[0].mxu0 %v701
        %v1000 = vpop.f32.mrb[0].mxu0
        %v1001 = vadd.f32 0.0, %v1000
        %v1002 = vpop.f32.mrb[0].mxu0
        %1003 = vmatprep.mubr.f32.mxu0 0.0
        %1004 = vmatmul.mubr.f32.gmra.mrb[0].mxu0 %v704
        %v1005 = vpop.f32.mrb[0].mxu0
        %v1006 = vadd.f32 0.0, %v1005
        %v1007 = vpop.f32.mrb[0].mxu0
        %1008 = vmatprep.mubr.f32.mxu0 0.0
        %1009 = vmatmul.mubr.f32.gmra.mrb[0].mxu0 %v707
        %v1010 = vpop.f32.mrb[0].mxu0
        %v1011 = vadd.f32 0.0, %v1010
        %v1012 = vpop.f32.mrb[0].mxu0
        %1013 = vmatprep.mubr.f32.mxu0 0.0
        %1014 = vmatmul.mubr.f32.gmra.mrb[0].mxu0 %v710
        %v1015 = vpop.f32.mrb[0].mxu0
        %v1016 = vadd.f32 0.0, %v1015
        %v1017 = vpop.f32.mrb[0].mxu0
        %1018 = vmatprep.mubr.f32.mxu0 0.0
        %1019 = vmatmul.mubr.f32.gmra.mrb[0].mxu0 %v713
        %v1020 = vpop.f32.mrb[0].mxu0
        %v1021 = vadd.f32 0.0, %v1020
        %v1022 = vpop.f32.mrb[0].mxu0
        %1023 = vmatprep.mubr.f32.mxu0 0.0
        %1024 = vmatmul.mubr.f32.gmra.mrb[0].mxu0 %v716
        %v1025 = vpop.f32.mrb[0].mxu0
        %v1026 = vadd.f32 0.0, %v1025
        %v1027 = vpop.f32.mrb[0].mxu0
        %1028 = vmatprep.mubr.f32.mxu0 0.0
        %1029 = vmatmul.mubr.f32.gmra.mrb[0].mxu0 %v719
        %v1030 = vpop.f32.mrb[0].mxu0
        %v1031 = vadd.f32 0.0, %v1030
        %v1032 = vpop.f32.mrb[0].mxu0
        %1033 = vmatprep.mubr.f32.mxu0 0.0
        %1034 = vmatmul.mubr.f32.gmra.mrb[0].mxu0 %v722
        %v1035 = vpop.f32.mrb[0].mxu0
        %v1036 = vadd.f32 0.0, %v1035
        %v1037 = vpop.f32.mrb[0].mxu0
        %1038 = vmatprep.mubr.f32.mxu0 0.0
        %1039 = vmatmul.mubr.f32.gmra.mrb[0].mxu0 %v725
        %v1040 = vpop.f32.mrb[0].mxu0
        %v1041 = vadd.f32 0.0, %v1040
        %v1042 = vpop.f32.mrb[0].mxu0
        %1043 = vmatprep.mubr.f32.mxu0 0.0
        %1044 = vmatmul.mubr.f32.gmra.mrb[0].mxu0 %v728
        %v1045 = vpop.f32.mrb[0].mxu0
        %v1046 = vadd.f32 0.0, %v1045
        %v1047 = vpop.f32.mrb[0].mxu0
        %1048 = vmatprep.mubr.f32.mxu0 0.0
        %1049 = vmatmul.mubr.f32.gmra.mrb[0].mxu0 %v731
        %v1050 = vpop.f32.mrb[0].mxu0
        %v1051 = vadd.f32 0.0, %v1050
        %v1052 = vpop.f32.mrb[0].mxu0
        %1053 = vmatprep.mubr.f32.mxu0 0.0
        %1054 = vmatmul.mubr.f32.gmra.mrb[0].mxu0 %v734
        %v1055 = vpop.f32.mrb[0].mxu0
        %v1056 = vadd.f32 0.0, %v1055
        %v1057 = vpop.f32.mrb[0].mxu0
        %1058 = vmatprep.mubr.f32.mxu0 0.0
        %1059 = vmatmul.mubr.f32.gmra.mrb[0].mxu0 %v737
        %v1060 = vpop.f32.mrb[0].mxu0
        %v1061 = vadd.f32 0.0, %v1060
        %v1062 = vpop.f32.mrb[0].mxu0
        %1063 = vmatprep.mubr.f32.mxu0 0.0
        %1064 = vmatmul.mubr.f32.gmra.mrb[0].mxu0 %v740
        %v1065 = vpop.f32.mrb[0].mxu0
        %v1066 = vadd.f32 0.0, %v1065
        %v1067 = vpop.f32.mrb[0].mxu0
        %1068 = vmatprep.mubr.f32.mxu0 0.0
        %1069 = vmatmul.mubr.f32.gmra.mrb[0].mxu0 %v743
        %v1070 = vpop.f32.mrb[0].mxu0
        %v1071 = vadd.f32 0.0, %v1070
        %v1072 = vpop.f32.mrb[0].mxu0
        %1073 = vmatprep.mubr.f32.mxu0 0.0
        %1074 = vmatmul.mubr.f32.gmra.mrb[0].mxu0 %v746
        %v1075 = vpop.f32.mrb[0].mxu0
        %v1076 = vadd.f32 0.0, %v1075
        %v1077 = vpop.f32.mrb[0].mxu0
        %1078 = vmatprep.mubr.f32.mxu0 0.0
        %1079 = vmatmul.mubr.f32.gmra.mrb[0].mxu0 %v749
        %v1080 = vpop.f32.mrb[0].mxu0
        %v1081 = vadd.f32 0.0, %v1080
        %v1082 = vpop.f32.mrb[0].mxu0
        %1083 = vmatprep.mubr.f32.mxu0 0.0
        %1084 = vmatmul.mubr.f32.gmra.mrb[0].mxu0 %v752
        %v1085 = vpop.f32.mrb[0].mxu0
        %v1086 = vadd.f32 0.0, %v1085
        %v1087 = vpop.f32.mrb[0].mxu0
        %1088 = vmatprep.mubr.f32.mxu0 0.0
        %1089 = vmatmul.mubr.f32.gmra.mrb[0].mxu0 %v755
        %v1090 = vpop.f32.mrb[0].mxu0
        %v1091 = vadd.f32 0.0, %v1090
        %v1092 = vpop.f32.mrb[0].mxu0
        %1093 = vmatprep.mubr.f32.mxu0 0.0
        %1094 = vmatmul.mubr.f32.gmra.mrb[0].mxu0 %v758
        %v1095 = vpop.f32.mrb[0].mxu0
        %v1096 = vadd.f32 0.0, %v1095
        %v1097 = vpop.f32.mrb[0].mxu0
        %1098 = vmatprep.mubr.f32.mxu0 0.0
        %1099 = vmatmul.mubr.f32.gmra.mrb[0].mxu0 %v761
        %v1100 = vpop.f32.mrb[0].mxu0
        %v1101 = vadd.f32 0.0, %v1100
        %v1102 = vpop.f32.mrb[0].mxu0
        %1103 = vmatprep.mubr.f32.mxu0 0.0
        %1104 = vmatmul.mubr.f32.gmra.mrb[0].mxu0 %v764
        %v1105 = vpop.f32.mrb[0].mxu0
        %v1106 = vadd.f32 0.0, %v1105
        %v1107 = vpop.f32.mrb[0].mxu0
        %1108 = vmatprep.mubr.f32.mxu0 0.0
        %1109 = vmatmul.mubr.f32.gmra.mrb[0].mxu0 %v767
        %v1110 = vpop.f32.mrb[0].mxu0
        %v1111 = vadd.f32 0.0, %v1110
        %v1112 = vpop.f32.mrb[0].mxu0
        %1113 = vmatprep.mubr.f32.mxu0 0.0
        %1114 = vmatmul.mubr.f32.gmra.mrb[0].mxu0 %v770
        %v1115 = vpop.f32.mrb[0].mxu0
        %v1116 = vadd.f32 0.0, %v1115
        %v1117 = vpop.f32.mrb[0].mxu0
        %1118 = vmatprep.mubr.f32.mxu0 0.0
        %1119 = vmatmul.mubr.f32.gmra.mrb[0].mxu0 %v773
        %v1120 = vpop.f32.mrb[0].mxu0
        %v1121 = vadd.f32 0.0, %v1120
        %v1122 = vpop.f32.mrb[0].mxu0
        %1123 = vmatprep.mubr.f32.mxu0 0.0
        %1124 = vmatmul.mubr.f32.gmra.mrb[0].mxu0 %v776
        %v1125 = vpop.f32.mrb[0].mxu0
        %v1126 = vadd.f32 0.0, %v1125
        %v1127 = vpop.f32.mrb[0].mxu0
        %1128 = vmatprep.mubr.f32.mxu0 0.0
        %1129 = vmatmul.mubr.f32.gmra.mrb[0].mxu0 %v779
        %v1130 = vpop.f32.mrb[0].mxu0
        %v1131 = vadd.f32 0.0, %v1130
        %v1132 = vpop.f32.mrb[0].mxu0
        %1133 = vmatprep.mubr.f32.mxu0 0.0
        %1134 = vmatmul.mubr.f32.gmra.mrb[0].mxu0 %v782
        %v1135 = vpop.f32.mrb[0].mxu0
        %v1136 = vadd.f32 0.0, %v1135
        %v1137 = vpop.f32.mrb[0].mxu0
        %1138 = vmatprep.mubr.f32.mxu0 0.0
        %1139 = vmatmul.mubr.f32.gmra.mrb[0].mxu0 %v785
        %v1140 = vpop.f32.mrb[0].mxu0
        %v1141 = vadd.f32 0.0, %v1140
        %v1142 = vpop.f32.mrb[0].mxu0
        %1143 = vmatprep.mubr.f32.mxu0 0.0
        %1144 = vmatmul.mubr.f32.gmra.mrb[0].mxu0 %v788
        %v1145 = vpop.f32.mrb[0].mxu0
        %v1146 = vadd.f32 0.0, %v1145
        %v1147 = vpop.f32.mrb[0].mxu0
        %1148 = vmatprep.mubr.f32.mxu0 0.0
        %1149 = vmatmul.mubr.f32.gmra.mrb[0].mxu0 %v791
        %v1150 = vpop.f32.mrb[0].mxu0
        %v1151 = vadd.f32 0.0, %v1150
        %v1152 = vpop.f32.mrb[0].mxu0
        %1153 = vmatprep.mubr.f32.mxu0 0.0
        %1154 = vmatmul.mubr.f32.gmra.mrb[0].mxu0 %v794
        %v1155 = vpop.f32.mrb[0].mxu0
        %v1156 = vadd.f32 0.0, %v1155
        %v1157 = vpop.f32.mrb[0].mxu0
        %1158 = vmatprep.mubr.f32.mxu0 0.0
        %1159 = vmatmul.mubr.f32.gmra.mrb[0].mxu0 %v797
        %v1160 = vpop.f32.mrb[0].mxu0
        %v1161 = vadd.f32 0.0, %v1160
        %v1162 = vpop.f32.mrb[0].mxu0
        %1163 = vmatprep.mubr.f32.mxu0 0.0
        %1164 = vmatmul.mubr.f32.gmra.mrb[0].mxu0 %v800
        %v1165 = vpop.f32.mrb[0].mxu0
        %v1166 = vadd.f32 0.0, %v1165
        %v1167 = vpop.f32.mrb[0].mxu0
        %1168 = vmatprep.mubr.f32.mxu0 0.0
        %1169 = vmatmul.mubr.f32.gmra.mrb[0].mxu0 %v803
        %v1170 = vpop.f32.mrb[0].mxu0
        %v1171 = vadd.f32 0.0, %v1170
        %v1172 = vpop.f32.mrb[0].mxu0
        %1173 = vmatprep.mubr.f32.mxu0 0.0
        %1174 = vmatmul.mubr.f32.gmra.mrb[0].mxu0 %v806
        %v1175 = vpop.f32.mrb[0].mxu0
        %v1176 = vadd.f32 0.0, %v1175
        %v1177 = vpop.f32.mrb[0].mxu0
        %1178 = vmatprep.mubr.f32.mxu0 0.0
        %1179 = vmatmul.mubr.f32.gmra.mrb[0].mxu0 %v809
        %v1180 = vpop.f32.mrb[0].mxu0
        %v1181 = vadd.f32 0.0, %v1180
        %v1182 = vpop.f32.mrb[0].mxu0
        %1183 = vmatprep.mubr.f32.mxu0 0.0
        %1184 = vmatmul.mubr.f32.gmra.mrb[0].mxu0 %v812
        %v1185 = vpop.f32.mrb[0].mxu0
        %v1186 = vadd.f32 0.0, %v1185
        %v1187 = vpop.f32.mrb[0].mxu0
        %1188 = vmatprep.mubr.f32.mxu0 0.0
        %1189 = vmatmul.mubr.f32.gmra.mrb[0].mxu0 %v815
        %v1190 = vpop.f32.mrb[0].mxu0
        %v1191 = vadd.f32 0.0, %v1190
        %v1192 = vpop.f32.mrb[0].mxu0
        %1193 = vmatprep.mubr.f32.mxu0 0.0
        %1194 = vmatmul.mubr.f32.gmra.mrb[0].mxu0 %v818
        %v1195 = vpop.f32.mrb[0].mxu0
        %v1196 = vadd.f32 0.0, %v1195
        %v1197 = vpop.f32.mrb[0].mxu0
        %1198 = vmatprep.mubr.f32.mxu0 0.0
        %1199 = vmatmul.mubr.f32.gmra.mrb[0].mxu0 %v821
        %v1200 = vpop.f32.mrb[0].mxu0
        %v1201 = vadd.f32 0.0, %v1200
        %v1202 = vpop.f32.mrb[0].mxu0
        %1203 = vmatprep.mubr.f32.mxu0 0.0
        %1204 = vmatmul.mubr.f32.gmra.mrb[0].mxu0 %v824
        %v1205 = vpop.f32.mrb[0].mxu0
        %v1206 = vadd.f32 0.0, %v1205
        %v1207 = vpop.f32.mrb[0].mxu0
        %1208 = vmatprep.mubr.f32.mxu0 0.0
        %1209 = vmatmul.mubr.f32.gmra.mrb[0].mxu0 %v827
        %v1210 = vpop.f32.mrb[0].mxu0
        %v1211 = vadd.f32 0.0, %v1210
        %v1212 = vpop.f32.mrb[0].mxu0
        %1213 = vdwg.mxu0
        %v1215 = vsel %vm285, %v356, 0
        %1217 = vmatprep.subr.mxu0 0.0
        %1218 = vmatpush1.msra.mxu0 %v896
        %1219 = vmatprep.subr.mxu0 0.0
        %1220 = vmatpush1.msra.mxu0 %v901
        %1221 = vmatprep.subr.mxu0 0.0
        %1222 = vmatpush1.msra.mxu0 %v906
        %1223 = vmatprep.subr.mxu0 0.0
        %1224 = vmatpush1.msra.mxu0 %v911
        %1225 = vmatprep.subr.mxu0 0.0
        %1226 = vmatpush1.msra.mxu0 %v916
        %1227 = vmatprep.subr.mxu0 0.0
        %1228 = vmatpush1.msra.mxu0 %v921
        %1229 = vmatprep.subr.mxu0 0.0
        %1230 = vmatpush1.msra.mxu0 %v926
        %1231 = vmatprep.subr.mxu0 0.0
        %1232 = vmatpush1.msra.mxu0 %v931
        %1233 = vmatprep.subr.mxu0 0.0
        %1234 = vmatpush1.msra.mxu0 0.0
        %1235 = vmatprep.subr.mxu0 0.0
        %1236 = vmatpush1.msra.mxu0 0.0
        %1237 = vmatprep.subr.mxu0 0.0
        %1238 = vmatpush1.msra.mxu0 0.0
        %1239 = vmatprep.subr.mxu0 0.0
        %1240 = vmatpush1.msra.mxu0 0.0
        %1241 = vmatprep.subr.mxu0 0.0
        %1242 = vmatpush1.msra.mxu0 0.0
        %1243 = vmatprep.subr.mxu0 0.0
        %1244 = vmatpush1.msra.mxu0 0.0
        %1245 = vmatprep.subr.mxu0 0.0
        %1246 = vmatpush1.msra.mxu0 0.0
        %1247 = vmatprep.subr.mxu0 0.0
        %1248 = vmatpush1.msra.mxu0 0.0
        %1249 = vmatprep.subr.mxu0 0.0
        %1250 = vmatpush1.msra.mxu0 0.0
        %1251 = vmatprep.subr.mxu0 0.0
        %1252 = vmatpush1.msra.mxu0 0.0
        %1253 = vmatprep.subr.mxu0 0.0
        %1254 = vmatpush1.msra.mxu0 0.0
        %1255 = vmatprep.subr.mxu0 0.0
        %1256 = vmatpush1.msra.mxu0 0.0
        %1257 = vmatprep.subr.mxu0 0.0
        %1258 = vmatpush1.msra.mxu0 0.0
        %1259 = vmatprep.subr.mxu0 0.0
        %1260 = vmatpush1.msra.mxu0 0.0
        %1261 = vmatprep.subr.mxu0 0.0
        %1262 = vmatpush1.msra.mxu0 0.0
        %1263 = vmatprep.subr.mxu0 0.0
        %1264 = vmatpush1.msra.mxu0 0.0
        %1265 = vmatprep.subr.mxu0 0.0
        %1266 = vmatpush1.msra.mxu0 0.0
        %1267 = vmatprep.subr.mxu0 0.0
        %1268 = vmatpush1.msra.mxu0 0.0
        %1269 = vmatprep.subr.mxu0 0.0
        %1270 = vmatpush1.msra.mxu0 0.0
        %1271 = vmatprep.subr.mxu0 0.0
        %1272 = vmatpush1.msra.mxu0 0.0
        %1273 = vmatprep.subr.mxu0 0.0
        %1274 = vmatpush1.msra.mxu0 0.0
        %1275 = vmatprep.subr.mxu0 0.0
        %1276 = vmatpush1.msra.mxu0 0.0
        %1277 = vmatprep.subr.mxu0 0.0
        %1278 = vmatpush1.msra.mxu0 0.0
        %1279 = vmatprep.subr.mxu0 0.0
        %1280 = vmatpush1.msra.mxu0 0.0
        %1281 = vmatprep.mubr.f32.mxu0 0.0
        %1282 = vmatmul.mubr.f32.gmra.mrb[0].mxu0 %v1215
        %v1283 = vpop.f32.mrb[0].mxu0
        %v1284 = vadd.f32 0.0, %v1283
        %v1285 = vpop.f32.mrb[0].mxu0
        %1286 = vdwg.mxu0
        %vm1287 = vcmask 64512
        %v1288 = vsel %vm1287, %v1284, -inf
        %1289 = vmax.xlane.f32.xlu0 %v1288
        %v1290 = vpop.xlane.xlu0 %1289
        %v1291 = vsub.f32 %v1284, %v1290
        %v1292 = vmul.f32 %v1291, 1.442695
        %v1293 = vpow.pop %v1292
        %v1294 = vsel %vm1287, %v1293, 0.0
        %1295 = vadd.xlane.f32.xlu0 %v1294
        %v1296 = vpop.xlane.xlu0 %1295
        %v1297 = vrcp.pop %v1296
        %v1298 = vmul.f32 %v1293, %v1297
        %v1300 = vsel %vm1287, %v1298, 0
        %1302 = vmatprep.subr.mxu0 0.0
        %1303 = vmatpush1.msra.mxu0 %v498
        %1304 = vmatprep.subr.mxu0 0.0
        %1305 = vmatpush1.msra.mxu0 0.0
        %1306 = vmatprep.subr.mxu0 0.0
        %1307 = vmatpush1.msra.mxu0 0.0
        %1308 = vmatprep.subr.mxu0 0.0
        %1309 = vmatpush1.msra.mxu0 0.0
        %1310 = vmatprep.subr.mxu0 0.0
        %1311 = vmatpush1.msra.mxu0 0.0
        %1312 = vmatprep.subr.mxu0 0.0
        %1313 = vmatpush1.msra.mxu0 0.0
        %1314 = vmatprep.subr.mxu0 0.0
        %1315 = vmatpush1.msra.mxu0 0.0
        %1316 = vmatprep.subr.mxu0 0.0
        %1317 = vmatpush1.msra.mxu0 0.0
        %1318 = vmatprep.subr.mxu0 0.0
        %1319 = vmatpush1.msra.mxu0 0.0
        %1320 = vmatprep.subr.mxu0 0.0
        %1321 = vmatpush1.msra.mxu0 0.0
        %1322 = vmatprep.subr.mxu0 0.0
        %1323 = vmatpush1.msra.mxu0 0.0
        %1324 = vmatprep.subr.mxu0 0.0
        %1325 = vmatpush1.msra.mxu0 0.0
        %1326 = vmatprep.subr.mxu0 0.0
        %1327 = vmatpush1.msra.mxu0 0.0
        %1328 = vmatprep.subr.mxu0 0.0
        %1329 = vmatpush1.msra.mxu0 0.0
        %1330 = vmatprep.subr.mxu0 0.0
        %1331 = vmatpush1.msra.mxu0 0.0
        %1332 = vmatprep.subr.mxu0 0.0
        %1333 = vmatpush1.msra.mxu0 0.0
        %1334 = vmatprep.subr.mxu0 0.0
        %1335 = vmatpush1.msra.mxu0 0.0
        %1336 = vmatprep.subr.mxu0 0.0
        %1337 = vmatpush1.msra.mxu0 0.0
        %1338 = vmatprep.subr.mxu0 0.0
        %1339 = vmatpush1.msra.mxu0 0.0
        %1340 = vmatprep.subr.mxu0 0.0
        %1341 = vmatpush1.msra.mxu0 0.0
        %1342 = vmatprep.subr.mxu0 0.0
        %1343 = vmatpush1.msra.mxu0 0.0
        %1344 = vmatprep.subr.mxu0 0.0
        %1345 = vmatpush1.msra.mxu0 0.0
        %1346 = vmatprep.subr.mxu0 0.0
        %1347 = vmatpush1.msra.mxu0 0.0
        %1348 = vmatprep.subr.mxu0 0.0
        %1349 = vmatpush1.msra.mxu0 0.0
        %1350 = vmatprep.subr.mxu0 0.0
        %1351 = vmatpush1.msra.mxu0 0.0
        %1352 = vmatprep.subr.mxu0 0.0
        %1353 = vmatpush1.msra.mxu0 0.0
        %1354 = vmatprep.subr.mxu0 0.0
        %1355 = vmatpush1.msra.mxu0 0.0
        %1356 = vmatprep.subr.mxu0 0.0
        %1357 = vmatpush1.msra.mxu0 0.0
        %1358 = vmatprep.subr.mxu0 0.0
        %1359 = vmatpush1.msra.mxu0 0.0
        %1360 = vmatprep.subr.mxu0 0.0
        %1361 = vmatpush1.msra.mxu0 0.0
        %1362 = vmatprep.subr.mxu0 0.0
        %1363 = vmatpush1.msra.mxu0 0.0
        %1364 = vmatprep.subr.mxu0 0.0
        %1365 = vmatpush1.msra.mxu0 0.0
        %1366 = vmatprep.mubr.f32.mxu0 0.0
        %1367 = vmatmul.mubr.f32.gmra.mrb[0].mxu0 %v1300
        %v1368 = vpop.f32.mrb[0].mxu0
        %v1369 = vadd.f32 0.0, %v1368
        %v1370 = vpop.f32.mrb[0].mxu0
        %1371 = vdwg.mxu0
        %1372 = vrot.lane.b32.xlu0 %v356, 64
        %v1373 = vpop.permute.xlu0 %1372
        %v1374 = vsel %vm285, %v1373, 0
        %1376 = vmatprep.subr.mxu0 0.0
        %1377 = vmatpush1.msra.mxu0 %v936
        %1378 = vmatprep.subr.mxu0 0.0
        %1379 = vmatpush1.msra.mxu0 %v941
        %1380 = vmatprep.subr.mxu0 0.0
        %1381 = vmatpush1.msra.mxu0 %v946
        %1382 = vmatprep.subr.mxu0 0.0
        %1383 = vmatpush1.msra.mxu0 %v951
        %1384 = vmatprep.subr.mxu0 0.0
        %1385 = vmatpush1.msra.mxu0 %v956
        %1386 = vmatprep.subr.mxu0 0.0
        %1387 = vmatpush1.msra.mxu0 %v961
        %1388 = vmatprep.subr.mxu0 0.0
        %1389 = vmatpush1.msra.mxu0 %v966
        %1390 = vmatprep.subr.mxu0 0.0
        %1391 = vmatpush1.msra.mxu0 %v971
        %1392 = vmatprep.subr.mxu0 0.0
        %1393 = vmatpush1.msra.mxu0 0.0
        %1394 = vmatprep.subr.mxu0 0.0
        %1395 = vmatpush1.msra.mxu0 0.0
        %1396 = vmatprep.subr.mxu0 0.0
        %1397 = vmatpush1.msra.mxu0 0.0
        %1398 = vmatprep.subr.mxu0 0.0
        %1399 = vmatpush1.msra.mxu0 0.0
        %1400 = vmatprep.subr.mxu0 0.0
        %1401 = vmatpush1.msra.mxu0 0.0
        %1402 = vmatprep.subr.mxu0 0.0
        %1403 = vmatpush1.msra.mxu0 0.0
        %1404 = vmatprep.subr.mxu0 0.0
        %1405 = vmatpush1.msra.mxu0 0.0
        %1406 = vmatprep.subr.mxu0 0.0
        %1407 = vmatpush1.msra.mxu0 0.0
        %1408 = vmatprep.subr.mxu0 0.0
        %1409 = vmatpush1.msra.mxu0 0.0
        %1410 = vmatprep.subr.mxu0 0.0
        %1411 = vmatpush1.msra.mxu0 0.0
        %1412 = vmatprep.subr.mxu0 0.0
        %1413 = vmatpush1.msra.mxu0 0.0
        %1414 = vmatprep.subr.mxu0 0.0
        %1415 = vmatpush1.msra.mxu0 0.0
        %1416 = vmatprep.subr.mxu0 0.0
        %1417 = vmatpush1.msra.mxu0 0.0
        %1418 = vmatprep.subr.mxu0 0.0
        %1419 = vmatpush1.msra.mxu0 0.0
        %1420 = vmatprep.subr.mxu0 0.0
        %1421 = vmatpush1.msra.mxu0 0.0
        %1422 = vmatprep.subr.mxu0 0.0
        %1423 = vmatpush1.msra.mxu0 0.0
        %1424 = vmatprep.subr.mxu0 0.0
        %1425 = vmatpush1.msra.mxu0 0.0
        %1426 = vmatprep.subr.mxu0 0.0
        %1427 = vmatpush1.msra.mxu0 0.0
        %1428 = vmatprep.subr.mxu0 0.0
        %1429 = vmatpush1.msra.mxu0 0.0
        %1430 = vmatprep.subr.mxu0 0.0
        %1431 = vmatpush1.msra.mxu0 0.0
        %1432 = vmatprep.subr.mxu0 0.0
        %1433 = vmatpush1.msra.mxu0 0.0
        %1434 = vmatprep.subr.mxu0 0.0
        %1435 = vmatpush1.msra.mxu0 0.0
        %1436 = vmatprep.subr.mxu0 0.0
        %1437 = vmatpush1.msra.mxu0 0.0
        %1438 = vmatprep.subr.mxu0 0.0
        %1439 = vmatpush1.msra.mxu0 0.0
        %1440 = vmatprep.mubr.f32.mxu0 0.0
        %1441 = vmatmul.mubr.f32.gmra.mrb[0].mxu0 %v1374
        %v1442 = vpop.f32.mrb[0].mxu0
        %v1443 = vadd.f32 0.0, %v1442
        %v1444 = vpop.f32.mrb[0].mxu0
        %1445 = vdwg.mxu0
        %v1446 = vsel %vm1287, %v1443, -inf
        %1447 = vmax.xlane.f32.xlu0 %v1446
        %v1448 = vpop.xlane.xlu0 %1447
        %v1449 = vsub.f32 %v1443, %v1448
        %v1450 = vmul.f32 %v1449, 1.442695
        %v1451 = vpow.pop %v1450
        %v1452 = vsel %vm1287, %v1451, 0.0
        %1453 = vadd.xlane.f32.xlu0 %v1452
        %v1454 = vpop.xlane.xlu0 %1453
        %v1455 = vrcp.pop %v1454
        %v1456 = vmul.f32 %v1451, %v1455
        %1458 = vrot.lane.b32.xlu0 %v498, 64
        %v1459 = vpop.permute.xlu0 %1458
        %v1462 = vsel %vm1287, %v1456, 0
        %1464 = vmatprep.subr.mxu0 0.0
        %1465 = vmatpush1.msra.mxu0 %v1459
        %1466 = vmatprep.subr.mxu0 0.0
        %1467 = vmatpush1.msra.mxu0 0.0
        %1468 = vmatprep.subr.mxu0 0.0
        %1469 = vmatpush1.msra.mxu0 0.0
        %1470 = vmatprep.subr.mxu0 0.0
        %1471 = vmatpush1.msra.mxu0 0.0
        %1472 = vmatprep.subr.mxu0 0.0
        %1473 = vmatpush1.msra.mxu0 0.0
        %1474 = vmatprep.subr.mxu0 0.0
        %1475 = vmatpush1.msra.mxu0 0.0
        %1476 = vmatprep.subr.mxu0 0.0
        %1477 = vmatpush1.msra.mxu0 0.0
        %1478 = vmatprep.subr.mxu0 0.0
        %1479 = vmatpush1.msra.mxu0 0.0
        %1480 = vmatprep.subr.mxu0 0.0
        %1481 = vmatpush1.msra.mxu0 0.0
        %1482 = vmatprep.subr.mxu0 0.0
        %1483 = vmatpush1.msra.mxu0 0.0
        %1484 = vmatprep.subr.mxu0 0.0
        %1485 = vmatpush1.msra.mxu0 0.0
        %1486 = vmatprep.subr.mxu0 0.0
        %1487 = vmatpush1.msra.mxu0 0.0
        %1488 = vmatprep.subr.mxu0 0.0
        %1489 = vmatpush1.msra.mxu0 0.0
        %1490 = vmatprep.subr.mxu0 0.0
        %1491 = vmatpush1.msra.mxu0 0.0
        %1492 = vmatprep.subr.mxu0 0.0
        %1493 = vmatpush1.msra.mxu0 0.0
        %1494 = vmatprep.subr.mxu0 0.0
        %1495 = vmatpush1.msra.mxu0 0.0
        %1496 = vmatprep.subr.mxu0 0.0
        %1497 = vmatpush1.msra.mxu0 0.0
        %1498 = vmatprep.subr.mxu0 0.0
        %1499 = vmatpush1.msra.mxu0 0.0
        %1500 = vmatprep.subr.mxu0 0.0
        %1501 = vmatpush1.msra.mxu0 0.0
        %1502 = vmatprep.subr.mxu0 0.0
        %1503 = vmatpush1.msra.mxu0 0.0
        %1504 = vmatprep.subr.mxu0 0.0
        %1505 = vmatpush1.msra.mxu0 0.0
        %1506 = vmatprep.subr.mxu0 0.0
        %1507 = vmatpush1.msra.mxu0 0.0
        %1508 = vmatprep.subr.mxu0 0.0
        %1509 = vmatpush1.msra.mxu0 0.0
        %1510 = vmatprep.subr.mxu0 0.0
        %1511 = vmatpush1.msra.mxu0 0.0
        %1512 = vmatprep.subr.mxu0 0.0
        %1513 = vmatpush1.msra.mxu0 0.0
        %1514 = vmatprep.subr.mxu0 0.0
        %1515 = vmatpush1.msra.mxu0 0.0
        %1516 = vmatprep.subr.mxu0 0.0
        %1517 = vmatpush1.msra.mxu0 0.0
        %1518 = vmatprep.subr.mxu0 0.0
        %1519 = vmatpush1.msra.mxu0 0.0
        %1520 = vmatprep.subr.mxu0 0.0
        %1521 = vmatpush1.msra.mxu0 0.0
        %1522 = vmatprep.subr.mxu0 0.0
        %1523 = vmatpush1.msra.mxu0 0.0
        %1524 = vmatprep.subr.mxu0 0.0
        %1525 = vmatpush1.msra.mxu0 0.0
        %1526 = vmatprep.subr.mxu0 0.0
        %1527 = vmatpush1.msra.mxu0 0.0
        %1528 = vmatprep.mubr.f32.mxu0 0.0
        %1529 = vmatmul.mubr.f32.gmra.mrb[0].mxu0 %v1462
        %v1530 = vpop.f32.mrb[0].mxu0
        %v1531 = vadd.f32 0.0, %v1530
        %v1532 = vpop.f32.mrb[0].mxu0
        %1533 = vdwg.mxu0
        %v1535 = vsel %vm285, %v358, 0
        %1537 = vmatprep.subr.mxu0 0.0
        %1538 = vmatpush1.msra.mxu0 %v976
        %1539 = vmatprep.subr.mxu0 0.0
        %1540 = vmatpush1.msra.mxu0 %v981
        %1541 = vmatprep.subr.mxu0 0.0
        %1542 = vmatpush1.msra.mxu0 %v986
        %1543 = vmatprep.subr.mxu0 0.0
        %1544 = vmatpush1.msra.mxu0 %v991
        %1545 = vmatprep.subr.mxu0 0.0
        %1546 = vmatpush1.msra.mxu0 %v996
        %1547 = vmatprep.subr.mxu0 0.0
        %1548 = vmatpush1.msra.mxu0 %v1001
        %1549 = vmatprep.subr.mxu0 0.0
        %1550 = vmatpush1.msra.mxu0 %v1006
        %1551 = vmatprep.subr.mxu0 0.0
        %1552 = vmatpush1.msra.mxu0 %v1011
        %1553 = vmatprep.subr.mxu0 0.0
        %1554 = vmatpush1.msra.mxu0 0.0
        %1555 = vmatprep.subr.mxu0 0.0
        %1556 = vmatpush1.msra.mxu0 0.0
        %1557 = vmatprep.subr.mxu0 0.0
        %1558 = vmatpush1.msra.mxu0 0.0
        %1559 = vmatprep.subr.mxu0 0.0
        %1560 = vmatpush1.msra.mxu0 0.0
        %1561 = vmatprep.subr.mxu0 0.0
        %1562 = vmatpush1.msra.mxu0 0.0
        %1563 = vmatprep.subr.mxu0 0.0
        %1564 = vmatpush1.msra.mxu0 0.0
        %1565 = vmatprep.subr.mxu0 0.0
        %1566 = vmatpush1.msra.mxu0 0.0
        %1567 = vmatprep.subr.mxu0 0.0
        %1568 = vmatpush1.msra.mxu0 0.0
        %1569 = vmatprep.subr.mxu0 0.0
        %1570 = vmatpush1.msra.mxu0 0.0
        %1571 = vmatprep.subr.mxu0 0.0
        %1572 = vmatpush1.msra.mxu0 0.0
        %1573 = vmatprep.subr.mxu0 0.0
        %1574 = vmatpush1.msra.mxu0 0.0
        %1575 = vmatprep.subr.mxu0 0.0
        %1576 = vmatpush1.msra.mxu0 0.0
        %1577 = vmatprep.subr.mxu0 0.0
        %1578 = vmatpush1.msra.mxu0 0.0
        %1579 = vmatprep.subr.mxu0 0.0
        %1580 = vmatpush1.msra.mxu0 0.0
        %1581 = vmatprep.subr.mxu0 0.0
        %1582 = vmatpush1.msra.mxu0 0.0
        %1583 = vmatprep.subr.mxu0 0.0
        %1584 = vmatpush1.msra.mxu0 0.0
        %1585 = vmatprep.subr.mxu0 0.0
        %1586 = vmatpush1.msra.mxu0 0.0
        %1587 = vmatprep.subr.mxu0 0.0
        %1588 = vmatpush1.msra.mxu0 0.0
        %1589 = vmatprep.subr.mxu0 0.0
        %1590 = vmatpush1.msra.mxu0 0.0
        %1591 = vmatprep.subr.mxu0 0.0
        %1592 = vmatpush1.msra.mxu0 0.0
        %1593 = vmatprep.subr.mxu0 0.0
        %1594 = vmatpush1.msra.mxu0 0.0
        %1595 = vmatprep.subr.mxu0 0.0
        %1596 = vmatpush1.msra.mxu0 0.0
        %1597 = vmatprep.subr.mxu0 0.0
        %1598 = vmatpush1.msra.mxu0 0.0
        %1599 = vmatprep.subr.mxu0 0.0
        %1600 = vmatpush1.msra.mxu0 0.0
        %1601 = vmatprep.mubr.f32.mxu0 0.0
        %1602 = vmatmul.mubr.f32.gmra.mrb[0].mxu0 %v1535
        %v1603 = vpop.f32.mrb[0].mxu0
        %v1604 = vadd.f32 0.0, %v1603
        %v1605 = vpop.f32.mrb[0].mxu0
        %1606 = vdwg.mxu0
        %v1607 = vsel %vm1287, %v1604, -inf
        %1608 = vmax.xlane.f32.xlu0 %v1607
        %v1609 = vpop.xlane.xlu0 %1608
        %v1610 = vsub.f32 %v1604, %v1609
        %v1611 = vmul.f32 %v1610, 1.442695
        %v1612 = vpow.pop %v1611
        %v1613 = vsel %vm1287, %v1612, 0.0
        %1614 = vadd.xlane.f32.xlu0 %v1613
        %v1615 = vpop.xlane.xlu0 %1614
        %v1616 = vrcp.pop %v1615
        %v1617 = vmul.f32 %v1612, %v1616
        %v1619 = vsel %vm1287, %v1617, 0
        %1621 = vmatprep.subr.mxu0 0.0
        %1622 = vmatpush1.msra.mxu0 %v500
        %1623 = vmatprep.subr.mxu0 0.0
        %1624 = vmatpush1.msra.mxu0 0.0
        %1625 = vmatprep.subr.mxu0 0.0
        %1626 = vmatpush1.msra.mxu0 0.0
        %1627 = vmatprep.subr.mxu0 0.0
        %1628 = vmatpush1.msra.mxu0 0.0
        %1629 = vmatprep.subr.mxu0 0.0
        %1630 = vmatpush1.msra.mxu0 0.0
        %1631 = vmatprep.subr.mxu0 0.0
        %1632 = vmatpush1.msra.mxu0 0.0
        %1633 = vmatprep.subr.mxu0 0.0
        %1634 = vmatpush1.msra.mxu0 0.0
        %1635 = vmatprep.subr.mxu0 0.0
        %1636 = vmatpush1.msra.mxu0 0.0
        %1637 = vmatprep.subr.mxu0 0.0
        %1638 = vmatpush1.msra.mxu0 0.0
        %1639 = vmatprep.subr.mxu0 0.0
        %1640 = vmatpush1.msra.mxu0 0.0
        %1641 = vmatprep.subr.mxu0 0.0
        %1642 = vmatpush1.msra.mxu0 0.0
        %1643 = vmatprep.subr.mxu0 0.0
        %1644 = vmatpush1.msra.mxu0 0.0
        %1645 = vmatprep.subr.mxu0 0.0
        %1646 = vmatpush1.msra.mxu0 0.0
        %1647 = vmatprep.subr.mxu0 0.0
        %1648 = vmatpush1.msra.mxu0 0.0
        %1649 = vmatprep.subr.mxu0 0.0
        %1650 = vmatpush1.msra.mxu0 0.0
        %1651 = vmatprep.subr.mxu0 0.0
        %1652 = vmatpush1.msra.mxu0 0.0
        %1653 = vmatprep.subr.mxu0 0.0
        %1654 = vmatpush1.msra.mxu0 0.0
        %1655 = vmatprep.subr.mxu0 0.0
        %1656 = vmatpush1.msra.mxu0 0.0
        %1657 = vmatprep.subr.mxu0 0.0
        %1658 = vmatpush1.msra.mxu0 0.0
        %1659 = vmatprep.subr.mxu0 0.0
        %1660 = vmatpush1.msra.mxu0 0.0
        %1661 = vmatprep.subr.mxu0 0.0
        %1662 = vmatpush1.msra.mxu0 0.0
        %1663 = vmatprep.subr.mxu0 0.0
        %1664 = vmatpush1.msra.mxu0 0.0
        %1665 = vmatprep.subr.mxu0 0.0
        %1666 = vmatpush1.msra.mxu0 0.0
        %1667 = vmatprep.subr.mxu0 0.0
        %1668 = vmatpush1.msra.mxu0 0.0
        %1669 = vmatprep.subr.mxu0 0.0
        %1670 = vmatpush1.msra.mxu0 0.0
        %1671 = vmatprep.subr.mxu0 0.0
        %1672 = vmatpush1.msra.mxu0 0.0
        %1673 = vmatprep.subr.mxu0 0.0
        %1674 = vmatpush1.msra.mxu0 0.0
        %1675 = vmatprep.subr.mxu0 0.0
        %1676 = vmatpush1.msra.mxu0 0.0
        %1677 = vmatprep.subr.mxu0 0.0
        %1678 = vmatpush1.msra.mxu0 0.0
        %1679 = vmatprep.subr.mxu0 0.0
        %1680 = vmatpush1.msra.mxu0 0.0
        %1681 = vmatprep.subr.mxu0 0.0
        %1682 = vmatpush1.msra.mxu0 0.0
        %1683 = vmatprep.subr.mxu0 0.0
        %1684 = vmatpush1.msra.mxu0 0.0
        %1685 = vmatprep.mubr.f32.mxu0 0.0
        %1686 = vmatmul.mubr.f32.gmra.mrb[0].mxu0 %v1619
        %v1687 = vpop.f32.mrb[0].mxu0
        %v1688 = vadd.f32 0.0, %v1687
        %v1689 = vpop.f32.mrb[0].mxu0
        %1690 = vdwg.mxu0
        %1691 = vrot.lane.b32.xlu0 %v358, 64
        %v1692 = vpop.permute.xlu0 %1691
        %v1693 = vsel %vm285, %v1692, 0
        %1695 = vmatprep.subr.mxu0 0.0
        %1696 = vmatpush1.msra.mxu0 %v1016
        %1697 = vmatprep.subr.mxu0 0.0
        %1698 = vmatpush1.msra.mxu0 %v1021
        %1699 = vmatprep.subr.mxu0 0.0
        %1700 = vmatpush1.msra.mxu0 %v1026
        %1701 = vmatprep.subr.mxu0 0.0
        %1702 = vmatpush1.msra.mxu0 %v1031
        %1703 = vmatprep.subr.mxu0 0.0
        %1704 = vmatpush1.msra.mxu0 %v1036
        %1705 = vmatprep.subr.mxu0 0.0
        %1706 = vmatpush1.msra.mxu0 %v1041
        %1707 = vmatprep.subr.mxu0 0.0
        %1708 = vmatpush1.msra.mxu0 %v1046
        %1709 = vmatprep.subr.mxu0 0.0
        %1710 = vmatpush1.msra.mxu0 %v1051
        %1711 = vmatprep.subr.mxu0 0.0
        %1712 = vmatpush1.msra.mxu0 0.0
        %1713 = vmatprep.subr.mxu0 0.0
        %1714 = vmatpush1.msra.mxu0 0.0
        %1715 = vmatprep.subr.mxu0 0.0
        %1716 = vmatpush1.msra.mxu0 0.0
        %1717 = vmatprep.subr.mxu0 0.0
        %1718 = vmatpush1.msra.mxu0 0.0
        %1719 = vmatprep.subr.mxu0 0.0
        %1720 = vmatpush1.msra.mxu0 0.0
        %1721 = vmatprep.subr.mxu0 0.0
        %1722 = vmatpush1.msra.mxu0 0.0
        %1723 = vmatprep.subr.mxu0 0.0
        %1724 = vmatpush1.msra.mxu0 0.0
        %1725 = vmatprep.subr.mxu0 0.0
        %1726 = vmatpush1.msra.mxu0 0.0
        %1727 = vmatprep.subr.mxu0 0.0
        %1728 = vmatpush1.msra.mxu0 0.0
        %1729 = vmatprep.subr.mxu0 0.0
        %1730 = vmatpush1.msra.mxu0 0.0
        %1731 = vmatprep.subr.mxu0 0.0
        %1732 = vmatpush1.msra.mxu0 0.0
        %1733 = vmatprep.subr.mxu0 0.0
        %1734 = vmatpush1.msra.mxu0 0.0
        %1735 = vmatprep.subr.mxu0 0.0
        %1736 = vmatpush1.msra.mxu0 0.0
        %1737 = vmatprep.subr.mxu0 0.0
        %1738 = vmatpush1.msra.mxu0 0.0
        %1739 = vmatprep.subr.mxu0 0.0
        %1740 = vmatpush1.msra.mxu0 0.0
        %1741 = vmatprep.subr.mxu0 0.0
        %1742 = vmatpush1.msra.mxu0 0.0
        %1743 = vmatprep.subr.mxu0 0.0
        %1744 = vmatpush1.msra.mxu0 0.0
        %1745 = vmatprep.subr.mxu0 0.0
        %1746 = vmatpush1.msra.mxu0 0.0
        %1747 = vmatprep.subr.mxu0 0.0
        %1748 = vmatpush1.msra.mxu0 0.0
        %1749 = vmatprep.subr.mxu0 0.0
        %1750 = vmatpush1.msra.mxu0 0.0
        %1751 = vmatprep.subr.mxu0 0.0
        %1752 = vmatpush1.msra.mxu0 0.0
        %1753 = vmatprep.subr.mxu0 0.0
        %1754 = vmatpush1.msra.mxu0 0.0
        %1755 = vmatprep.subr.mxu0 0.0
        %1756 = vmatpush1.msra.mxu0 0.0
        %1757 = vmatprep.subr.mxu0 0.0
        %1758 = vmatpush1.msra.mxu0 0.0
        %1759 = vmatprep.mubr.f32.mxu0 0.0
        %1760 = vmatmul.mubr.f32.gmra.mrb[0].mxu0 %v1693
        %v1761 = vpop.f32.mrb[0].mxu0
        %v1762 = vadd.f32 0.0, %v1761
        %v1763 = vpop.f32.mrb[0].mxu0
        %1764 = vdwg.mxu0
        %v1765 = vsel %vm1287, %v1762, -inf
        %1766 = vmax.xlane.f32.xlu0 %v1765
        %v1767 = vpop.xlane.xlu0 %1766
        %v1768 = vsub.f32 %v1762, %v1767
        %v1769 = vmul.f32 %v1768, 1.442695
        %v1770 = vpow.pop %v1769
        %v1771 = vsel %vm1287, %v1770, 0.0
        %1772 = vadd.xlane.f32.xlu0 %v1771
        %v1773 = vpop.xlane.xlu0 %1772
        %v1774 = vrcp.pop %v1773
        %v1775 = vmul.f32 %v1770, %v1774
        %1777 = vrot.lane.b32.xlu0 %v500, 64
        %v1778 = vpop.permute.xlu0 %1777
        %v1781 = vsel %vm1287, %v1775, 0
        %1783 = vmatprep.subr.mxu0 0.0
        %1784 = vmatpush1.msra.mxu0 %v1778
        %1785 = vmatprep.subr.mxu0 0.0
        %1786 = vmatpush1.msra.mxu0 0.0
        %1787 = vmatprep.subr.mxu0 0.0
        %1788 = vmatpush1.msra.mxu0 0.0
        %1789 = vmatprep.subr.mxu0 0.0
        %1790 = vmatpush1.msra.mxu0 0.0
        %1791 = vmatprep.subr.mxu0 0.0
        %1792 = vmatpush1.msra.mxu0 0.0
        %1793 = vmatprep.subr.mxu0 0.0
        %1794 = vmatpush1.msra.mxu0 0.0
        %1795 = vmatprep.subr.mxu0 0.0
        %1796 = vmatpush1.msra.mxu0 0.0
        %1797 = vmatprep.subr.mxu0 0.0
        %1798 = vmatpush1.msra.mxu0 0.0
        %1799 = vmatprep.subr.mxu0 0.0
        %1800 = vmatpush1.msra.mxu0 0.0
        %1801 = vmatprep.subr.mxu0 0.0
        %1802 = vmatpush1.msra.mxu0 0.0
        %1803 = vmatprep.subr.mxu0 0.0
        %1804 = vmatpush1.msra.mxu0 0.0
        %1805 = vmatprep.subr.mxu0 0.0
        %1806 = vmatpush1.msra.mxu0 0.0
        %1807 = vmatprep.subr.mxu0 0.0
        %1808 = vmatpush1.msra.mxu0 0.0
        %1809 = vmatprep.subr.mxu0 0.0
        %1810 = vmatpush1.msra.mxu0 0.0
        %1811 = vmatprep.subr.mxu0 0.0
        %1812 = vmatpush1.msra.mxu0 0.0
        %1813 = vmatprep.subr.mxu0 0.0
        %1814 = vmatpush1.msra.mxu0 0.0
        %1815 = vmatprep.subr.mxu0 0.0
        %1816 = vmatpush1.msra.mxu0 0.0
        %1817 = vmatprep.subr.mxu0 0.0
        %1818 = vmatpush1.msra.mxu0 0.0
        %1819 = vmatprep.subr.mxu0 0.0
        %1820 = vmatpush1.msra.mxu0 0.0
        %1821 = vmatprep.subr.mxu0 0.0
        %1822 = vmatpush1.msra.mxu0 0.0
        %1823 = vmatprep.subr.mxu0 0.0
        %1824 = vmatpush1.msra.mxu0 0.0
        %1825 = vmatprep.subr.mxu0 0.0
        %1826 = vmatpush1.msra.mxu0 0.0
        %1827 = vmatprep.subr.mxu0 0.0
        %1828 = vmatpush1.msra.mxu0 0.0
        %1829 = vmatprep.subr.mxu0 0.0
        %1830 = vmatpush1.msra.mxu0 0.0
        %1831 = vmatprep.subr.mxu0 0.0
        %1832 = vmatpush1.msra.mxu0 0.0
        %1833 = vmatprep.subr.mxu0 0.0
        %1834 = vmatpush1.msra.mxu0 0.0
        %1835 = vmatprep.subr.mxu0 0.0
        %1836 = vmatpush1.msra.mxu0 0.0
        %1837 = vmatprep.subr.mxu0 0.0
        %1838 = vmatpush1.msra.mxu0 0.0
        %1839 = vmatprep.subr.mxu0 0.0
        %1840 = vmatpush1.msra.mxu0 0.0
        %1841 = vmatprep.subr.mxu0 0.0
        %1842 = vmatpush1.msra.mxu0 0.0
        %1843 = vmatprep.subr.mxu0 0.0
        %1844 = vmatpush1.msra.mxu0 0.0
        %1845 = vmatprep.subr.mxu0 0.0
        %1846 = vmatpush1.msra.mxu0 0.0
        %1847 = vmatprep.mubr.f32.mxu0 0.0
        %1848 = vmatmul.mubr.f32.gmra.mrb[0].mxu0 %v1781
        %v1849 = vpop.f32.mrb[0].mxu0
        %v1850 = vadd.f32 0.0, %v1849
        %v1851 = vpop.f32.mrb[0].mxu0
        %1852 = vdwg.mxu0
        %v1854 = vsel %vm285, %v427, 0
        %1856 = vmatprep.subr.mxu0 0.0
        %1857 = vmatpush1.msra.mxu0 %v1056
        %1858 = vmatprep.subr.mxu0 0.0
        %1859 = vmatpush1.msra.mxu0 %v1061
        %1860 = vmatprep.subr.mxu0 0.0
        %1861 = vmatpush1.msra.mxu0 %v1066
        %1862 = vmatprep.subr.mxu0 0.0
        %1863 = vmatpush1.msra.mxu0 %v1071
        %1864 = vmatprep.subr.mxu0 0.0
        %1865 = vmatpush1.msra.mxu0 %v1076
        %1866 = vmatprep.subr.mxu0 0.0
        %1867 = vmatpush1.msra.mxu0 %v1081
        %1868 = vmatprep.subr.mxu0 0.0
        %1869 = vmatpush1.msra.mxu0 %v1086
        %1870 = vmatprep.subr.mxu0 0.0
        %1871 = vmatpush1.msra.mxu0 %v1091
        %1872 = vmatprep.subr.mxu0 0.0
        %1873 = vmatpush1.msra.mxu0 0.0
        %1874 = vmatprep.subr.mxu0 0.0
        %1875 = vmatpush1.msra.mxu0 0.0
        %1876 = vmatprep.subr.mxu0 0.0
        %1877 = vmatpush1.msra.mxu0 0.0
        %1878 = vmatprep.subr.mxu0 0.0
        %1879 = vmatpush1.msra.mxu0 0.0
        %1880 = vmatprep.subr.mxu0 0.0
        %1881 = vmatpush1.msra.mxu0 0.0
        %1882 = vmatprep.subr.mxu0 0.0
        %1883 = vmatpush1.msra.mxu0 0.0
        %1884 = vmatprep.subr.mxu0 0.0
        %1885 = vmatpush1.msra.mxu0 0.0
        %1886 = vmatprep.subr.mxu0 0.0
        %1887 = vmatpush1.msra.mxu0 0.0
        %1888 = vmatprep.subr.mxu0 0.0
        %1889 = vmatpush1.msra.mxu0 0.0
        %1890 = vmatprep.subr.mxu0 0.0
        %1891 = vmatpush1.msra.mxu0 0.0
        %1892 = vmatprep.subr.mxu0 0.0
        %1893 = vmatpush1.msra.mxu0 0.0
        %1894 = vmatprep.subr.mxu0 0.0
        %1895 = vmatpush1.msra.mxu0 0.0
        %1896 = vmatprep.subr.mxu0 0.0
        %1897 = vmatpush1.msra.mxu0 0.0
        %1898 = vmatprep.subr.mxu0 0.0
        %1899 = vmatpush1.msra.mxu0 0.0
        %1900 = vmatprep.subr.mxu0 0.0
        %1901 = vmatpush1.msra.mxu0 0.0
        %1902 = vmatprep.subr.mxu0 0.0
        %1903 = vmatpush1.msra.mxu0 0.0
        %1904 = vmatprep.subr.mxu0 0.0
        %1905 = vmatpush1.msra.mxu0 0.0
        %1906 = vmatprep.subr.mxu0 0.0
        %1907 = vmatpush1.msra.mxu0 0.0
        %1908 = vmatprep.subr.mxu0 0.0
        %1909 = vmatpush1.msra.mxu0 0.0
        %1910 = vmatprep.subr.mxu0 0.0
        %1911 = vmatpush1.msra.mxu0 0.0
        %1912 = vmatprep.subr.mxu0 0.0
        %1913 = vmatpush1.msra.mxu0 0.0
        %1914 = vmatprep.subr.mxu0 0.0
        %1915 = vmatpush1.msra.mxu0 0.0
        %1916 = vmatprep.subr.mxu0 0.0
        %1917 = vmatpush1.msra.mxu0 0.0
        %1918 = vmatprep.subr.mxu0 0.0
        %1919 = vmatpush1.msra.mxu0 0.0
        %1920 = vmatprep.mubr.f32.mxu0 0.0
        %1921 = vmatmul.mubr.f32.gmra.mrb[0].mxu0 %v1854
        %v1922 = vpop.f32.mrb[0].mxu0
        %v1923 = vadd.f32 0.0, %v1922
        %v1924 = vpop.f32.mrb[0].mxu0
        %1925 = vdwg.mxu0
        %v1926 = vsel %vm1287, %v1923, -inf
        %1927 = vmax.xlane.f32.xlu0 %v1926
        %v1928 = vpop.xlane.xlu0 %1927
        %v1929 = vsub.f32 %v1923, %v1928
        %v1930 = vmul.f32 %v1929, 1.442695
        %v1931 = vpow.pop %v1930
        %v1932 = vsel %vm1287, %v1931, 0.0
        %1933 = vadd.xlane.f32.xlu0 %v1932
        %v1934 = vpop.xlane.xlu0 %1933
        %v1935 = vrcp.pop %v1934
        %v1936 = vmul.f32 %v1931, %v1935
        %v1938 = vsel %vm1287, %v1936, 0
        %1940 = vmatprep.subr.mxu0 0.0
        %1941 = vmatpush1.msra.mxu0 %v569
        %1942 = vmatprep.subr.mxu0 0.0
        %1943 = vmatpush1.msra.mxu0 0.0
        %1944 = vmatprep.subr.mxu0 0.0
        %1945 = vmatpush1.msra.mxu0 0.0
        %1946 = vmatprep.subr.mxu0 0.0
        %1947 = vmatpush1.msra.mxu0 0.0
        %1948 = vmatprep.subr.mxu0 0.0
        %1949 = vmatpush1.msra.mxu0 0.0
        %1950 = vmatprep.subr.mxu0 0.0
        %1951 = vmatpush1.msra.mxu0 0.0
        %1952 = vmatprep.subr.mxu0 0.0
        %1953 = vmatpush1.msra.mxu0 0.0
        %1954 = vmatprep.subr.mxu0 0.0
        %1955 = vmatpush1.msra.mxu0 0.0
        %1956 = vmatprep.subr.mxu0 0.0
        %1957 = vmatpush1.msra.mxu0 0.0
        %1958 = vmatprep.subr.mxu0 0.0
        %1959 = vmatpush1.msra.mxu0 0.0
        %1960 = vmatprep.subr.mxu0 0.0
        %1961 = vmatpush1.msra.mxu0 0.0
        %1962 = vmatprep.subr.mxu0 0.0
        %1963 = vmatpush1.msra.mxu0 0.0
        %1964 = vmatprep.subr.mxu0 0.0
        %1965 = vmatpush1.msra.mxu0 0.0
        %1966 = vmatprep.subr.mxu0 0.0
        %1967 = vmatpush1.msra.mxu0 0.0
        %1968 = vmatprep.subr.mxu0 0.0
        %1969 = vmatpush1.msra.mxu0 0.0
        %1970 = vmatprep.subr.mxu0 0.0
        %1971 = vmatpush1.msra.mxu0 0.0
        %1972 = vmatprep.subr.mxu0 0.0
        %1973 = vmatpush1.msra.mxu0 0.0
        %1974 = vmatprep.subr.mxu0 0.0
        %1975 = vmatpush1.msra.mxu0 0.0
        %1976 = vmatprep.subr.mxu0 0.0
        %1977 = vmatpush1.msra.mxu0 0.0
        %1978 = vmatprep.subr.mxu0 0.0
        %1979 = vmatpush1.msra.mxu0 0.0
        %1980 = vmatprep.subr.mxu0 0.0
        %1981 = vmatpush1.msra.mxu0 0.0
        %1982 = vmatprep.subr.mxu0 0.0
        %1983 = vmatpush1.msra.mxu0 0.0
        %1984 = vmatprep.subr.mxu0 0.0
        %1985 = vmatpush1.msra.mxu0 0.0
        %1986 = vmatprep.subr.mxu0 0.0
        %1987 = vmatpush1.msra.mxu0 0.0
        %1988 = vmatprep.subr.mxu0 0.0
        %1989 = vmatpush1.msra.mxu0 0.0
        %1990 = vmatprep.subr.mxu0 0.0
        %1991 = vmatpush1.msra.mxu0 0.0
        %1992 = vmatprep.subr.mxu0 0.0
        %1993 = vmatpush1.msra.mxu0 0.0
        %1994 = vmatprep.subr.mxu0 0.0
        %1995 = vmatpush1.msra.mxu0 0.0
        %1996 = vmatprep.subr.mxu0 0.0
        %1997 = vmatpush1.msra.mxu0 0.0
        %1998 = vmatprep.subr.mxu0 0.0
        %1999 = vmatpush1.msra.mxu0 0.0
        %2000 = vmatprep.subr.mxu0 0.0
        %2001 = vmatpush1.msra.mxu0 0.0
        %2002 = vmatprep.subr.mxu0 0.0
        %2003 = vmatpush1.msra.mxu0 0.0
        %2004 = vmatprep.mubr.f32.mxu0 0.0
        %2005 = vmatmul.mubr.f32.gmra.mrb[0].mxu0 %v1938
        %v2006 = vpop.f32.mrb[0].mxu0
        %v2007 = vadd.f32 0.0, %v2006
        %v2008 = vpop.f32.mrb[0].mxu0
        %2009 = vdwg.mxu0
        %2010 = vrot.lane.b32.xlu0 %v427, 64
        %v2011 = vpop.permute.xlu0 %2010
        %v2012 = vsel %vm285, %v2011, 0
        %2014 = vmatprep.subr.mxu0 0.0
        %2015 = vmatpush1.msra.mxu0 %v1096
        %2016 = vmatprep.subr.mxu0 0.0
        %2017 = vmatpush1.msra.mxu0 %v1101
        %2018 = vmatprep.subr.mxu0 0.0
        %2019 = vmatpush1.msra.mxu0 %v1106
        %2020 = vmatprep.subr.mxu0 0.0
        %2021 = vmatpush1.msra.mxu0 %v1111
        %2022 = vmatprep.subr.mxu0 0.0
        %2023 = vmatpush1.msra.mxu0 %v1116
        %2024 = vmatprep.subr.mxu0 0.0
        %2025 = vmatpush1.msra.mxu0 %v1121
        %2026 = vmatprep.subr.mxu0 0.0
        %2027 = vmatpush1.msra.mxu0 %v1126
        %2028 = vmatprep.subr.mxu0 0.0
        %2029 = vmatpush1.msra.mxu0 %v1131
        %2030 = vmatprep.subr.mxu0 0.0
        %2031 = vmatpush1.msra.mxu0 0.0
        %2032 = vmatprep.subr.mxu0 0.0
        %2033 = vmatpush1.msra.mxu0 0.0
        %2034 = vmatprep.subr.mxu0 0.0
        %2035 = vmatpush1.msra.mxu0 0.0
        %2036 = vmatprep.subr.mxu0 0.0
        %2037 = vmatpush1.msra.mxu0 0.0
        %2038 = vmatprep.subr.mxu0 0.0
        %2039 = vmatpush1.msra.mxu0 0.0
        %2040 = vmatprep.subr.mxu0 0.0
        %2041 = vmatpush1.msra.mxu0 0.0
        %2042 = vmatprep.subr.mxu0 0.0
        %2043 = vmatpush1.msra.mxu0 0.0
        %2044 = vmatprep.subr.mxu0 0.0
        %2045 = vmatpush1.msra.mxu0 0.0
        %2046 = vmatprep.subr.mxu0 0.0
        %2047 = vmatpush1.msra.mxu0 0.0
        %2048 = vmatprep.subr.mxu0 0.0
        %2049 = vmatpush1.msra.mxu0 0.0
        %2050 = vmatprep.subr.mxu0 0.0
        %2051 = vmatpush1.msra.mxu0 0.0
        %2052 = vmatprep.subr.mxu0 0.0
        %2053 = vmatpush1.msra.mxu0 0.0
        %2054 = vmatprep.subr.mxu0 0.0
        %2055 = vmatpush1.msra.mxu0 0.0
        %2056 = vmatprep.subr.mxu0 0.0
        %2057 = vmatpush1.msra.mxu0 0.0
        %2058 = vmatprep.subr.mxu0 0.0
        %2059 = vmatpush1.msra.mxu0 0.0
        %2060 = vmatprep.subr.mxu0 0.0
        %2061 = vmatpush1.msra.mxu0 0.0
        %2062 = vmatprep.subr.mxu0 0.0
        %2063 = vmatpush1.msra.mxu0 0.0
        %2064 = vmatprep.subr.mxu0 0.0
        %2065 = vmatpush1.msra.mxu0 0.0
        %2066 = vmatprep.subr.mxu0 0.0
        %2067 = vmatpush1.msra.mxu0 0.0
        %2068 = vmatprep.subr.mxu0 0.0
        %2069 = vmatpush1.msra.mxu0 0.0
        %2070 = vmatprep.subr.mxu0 0.0
        %2071 = vmatpush1.msra.mxu0 0.0
        %2072 = vmatprep.subr.mxu0 0.0
        %2073 = vmatpush1.msra.mxu0 0.0
        %2074 = vmatprep.subr.mxu0 0.0
        %2075 = vmatpush1.msra.mxu0 0.0
        %2076 = vmatprep.subr.mxu0 0.0
        %2077 = vmatpush1.msra.mxu0 0.0
        %2078 = vmatprep.mubr.f32.mxu0 0.0
        %2079 = vmatmul.mubr.f32.gmra.mrb[0].mxu0 %v2012
        %v2080 = vpop.f32.mrb[0].mxu0
        %v2081 = vadd.f32 0.0, %v2080
        %v2082 = vpop.f32.mrb[0].mxu0
        %2083 = vdwg.mxu0
        %v2084 = vsel %vm1287, %v2081, -inf
        %2085 = vmax.xlane.f32.xlu0 %v2084
        %v2086 = vpop.xlane.xlu0 %2085
        %v2087 = vsub.f32 %v2081, %v2086
        %v2088 = vmul.f32 %v2087, 1.442695
        %v2089 = vpow.pop %v2088
        %v2090 = vsel %vm1287, %v2089, 0.0
        %2091 = vadd.xlane.f32.xlu0 %v2090
        %v2092 = vpop.xlane.xlu0 %2091
        %v2093 = vrcp.pop %v2092
        %v2094 = vmul.f32 %v2089, %v2093
        %2096 = vrot.lane.b32.xlu0 %v569, 64
        %v2097 = vpop.permute.xlu0 %2096
        %v2100 = vsel %vm1287, %v2094, 0
        %2102 = vmatprep.subr.mxu0 0.0
        %2103 = vmatpush1.msra.mxu0 %v2097
        %2104 = vmatprep.subr.mxu0 0.0
        %2105 = vmatpush1.msra.mxu0 0.0
        %2106 = vmatprep.subr.mxu0 0.0
        %2107 = vmatpush1.msra.mxu0 0.0
        %2108 = vmatprep.subr.mxu0 0.0
        %2109 = vmatpush1.msra.mxu0 0.0
        %2110 = vmatprep.subr.mxu0 0.0
        %2111 = vmatpush1.msra.mxu0 0.0
        %2112 = vmatprep.subr.mxu0 0.0
        %2113 = vmatpush1.msra.mxu0 0.0
        %2114 = vmatprep.subr.mxu0 0.0
        %2115 = vmatpush1.msra.mxu0 0.0
        %2116 = vmatprep.subr.mxu0 0.0
        %2117 = vmatpush1.msra.mxu0 0.0
        %2118 = vmatprep.subr.mxu0 0.0
        %2119 = vmatpush1.msra.mxu0 0.0
        %2120 = vmatprep.subr.mxu0 0.0
        %2121 = vmatpush1.msra.mxu0 0.0
        %2122 = vmatprep.subr.mxu0 0.0
        %2123 = vmatpush1.msra.mxu0 0.0
        %2124 = vmatprep.subr.mxu0 0.0
        %2125 = vmatpush1.msra.mxu0 0.0
        %2126 = vmatprep.subr.mxu0 0.0
        %2127 = vmatpush1.msra.mxu0 0.0
        %2128 = vmatprep.subr.mxu0 0.0
        %2129 = vmatpush1.msra.mxu0 0.0
        %2130 = vmatprep.subr.mxu0 0.0
        %2131 = vmatpush1.msra.mxu0 0.0
        %2132 = vmatprep.subr.mxu0 0.0
        %2133 = vmatpush1.msra.mxu0 0.0
        %2134 = vmatprep.subr.mxu0 0.0
        %2135 = vmatpush1.msra.mxu0 0.0
        %2136 = vmatprep.subr.mxu0 0.0
        %2137 = vmatpush1.msra.mxu0 0.0
        %2138 = vmatprep.subr.mxu0 0.0
        %2139 = vmatpush1.msra.mxu0 0.0
        %2140 = vmatprep.subr.mxu0 0.0
        %2141 = vmatpush1.msra.mxu0 0.0
        %2142 = vmatprep.subr.mxu0 0.0
        %2143 = vmatpush1.msra.mxu0 0.0
        %2144 = vmatprep.subr.mxu0 0.0
        %2145 = vmatpush1.msra.mxu0 0.0
        %2146 = vmatprep.subr.mxu0 0.0
        %2147 = vmatpush1.msra.mxu0 0.0
        %2148 = vmatprep.subr.mxu0 0.0
        %2149 = vmatpush1.msra.mxu0 0.0
        %2150 = vmatprep.subr.mxu0 0.0
        %2151 = vmatpush1.msra.mxu0 0.0
        %2152 = vmatprep.subr.mxu0 0.0
        %2153 = vmatpush1.msra.mxu0 0.0
        %2154 = vmatprep.subr.mxu0 0.0
        %2155 = vmatpush1.msra.mxu0 0.0
        %2156 = vmatprep.subr.mxu0 0.0
        %2157 = vmatpush1.msra.mxu0 0.0
        %2158 = vmatprep.subr.mxu0 0.0
        %2159 = vmatpush1.msra.mxu0 0.0
        %2160 = vmatprep.subr.mxu0 0.0
        %2161 = vmatpush1.msra.mxu0 0.0
        %2162 = vmatprep.subr.mxu0 0.0
        %2163 = vmatpush1.msra.mxu0 0.0
        %2164 = vmatprep.subr.mxu0 0.0
        %2165 = vmatpush1.msra.mxu0 0.0
        %2166 = vmatprep.mubr.f32.mxu0 0.0
        %2167 = vmatmul.mubr.f32.gmra.mrb[0].mxu0 %v2100
        %v2168 = vpop.f32.mrb[0].mxu0
        %v2169 = vadd.f32 0.0, %v2168
        %v2170 = vpop.f32.mrb[0].mxu0
        %2171 = vdwg.mxu0
        %v2173 = vsel %vm285, %v429, 0
        %2175 = vmatprep.subr.mxu0 0.0
        %2176 = vmatpush1.msra.mxu0 %v1136
        %2177 = vmatprep.subr.mxu0 0.0
        %2178 = vmatpush1.msra.mxu0 %v1141
        %2179 = vmatprep.subr.mxu0 0.0
        %2180 = vmatpush1.msra.mxu0 %v1146
        %2181 = vmatprep.subr.mxu0 0.0
        %2182 = vmatpush1.msra.mxu0 %v1151
        %2183 = vmatprep.subr.mxu0 0.0
        %2184 = vmatpush1.msra.mxu0 %v1156
        %2185 = vmatprep.subr.mxu0 0.0
        %2186 = vmatpush1.msra.mxu0 %v1161
        %2187 = vmatprep.subr.mxu0 0.0
        %2188 = vmatpush1.msra.mxu0 %v1166
        %2189 = vmatprep.subr.mxu0 0.0
        %2190 = vmatpush1.msra.mxu0 %v1171
        %2191 = vmatprep.subr.mxu0 0.0
        %2192 = vmatpush1.msra.mxu0 0.0
        %2193 = vmatprep.subr.mxu0 0.0
        %2194 = vmatpush1.msra.mxu0 0.0
        %2195 = vmatprep.subr.mxu0 0.0
        %2196 = vmatpush1.msra.mxu0 0.0
        %2197 = vmatprep.subr.mxu0 0.0
        %2198 = vmatpush1.msra.mxu0 0.0
        %2199 = vmatprep.subr.mxu0 0.0
        %2200 = vmatpush1.msra.mxu0 0.0
        %2201 = vmatprep.subr.mxu0 0.0
        %2202 = vmatpush1.msra.mxu0 0.0
        %2203 = vmatprep.subr.mxu0 0.0
        %2204 = vmatpush1.msra.mxu0 0.0
        %2205 = vmatprep.subr.mxu0 0.0
        %2206 = vmatpush1.msra.mxu0 0.0
        %2207 = vmatprep.subr.mxu0 0.0
        %2208 = vmatpush1.msra.mxu0 0.0
        %2209 = vmatprep.subr.mxu0 0.0
        %2210 = vmatpush1.msra.mxu0 0.0
        %2211 = vmatprep.subr.mxu0 0.0
        %2212 = vmatpush1.msra.mxu0 0.0
        %2213 = vmatprep.subr.mxu0 0.0
        %2214 = vmatpush1.msra.mxu0 0.0
        %2215 = vmatprep.subr.mxu0 0.0
        %2216 = vmatpush1.msra.mxu0 0.0
        %2217 = vmatprep.subr.mxu0 0.0
        %2218 = vmatpush1.msra.mxu0 0.0
        %2219 = vmatprep.subr.mxu0 0.0
        %2220 = vmatpush1.msra.mxu0 0.0
        %2221 = vmatprep.subr.mxu0 0.0
        %2222 = vmatpush1.msra.mxu0 0.0
        %2223 = vmatprep.subr.mxu0 0.0
        %2224 = vmatpush1.msra.mxu0 0.0
        %2225 = vmatprep.subr.mxu0 0.0
        %2226 = vmatpush1.msra.mxu0 0.0
        %2227 = vmatprep.subr.mxu0 0.0
        %2228 = vmatpush1.msra.mxu0 0.0
        %2229 = vmatprep.subr.mxu0 0.0
        %2230 = vmatpush1.msra.mxu0 0.0
        %2231 = vmatprep.subr.mxu0 0.0
        %2232 = vmatpush1.msra.mxu0 0.0
        %2233 = vmatprep.subr.mxu0 0.0
        %2234 = vmatpush1.msra.mxu0 0.0
        %2235 = vmatprep.subr.mxu0 0.0
        %2236 = vmatpush1.msra.mxu0 0.0
        %2237 = vmatprep.subr.mxu0 0.0
        %2238 = vmatpush1.msra.mxu0 0.0
        %2239 = vmatprep.mubr.f32.mxu0 0.0
        %2240 = vmatmul.mubr.f32.gmra.mrb[0].mxu0 %v2173
        %v2241 = vpop.f32.mrb[0].mxu0
        %v2242 = vadd.f32 0.0, %v2241
        %v2243 = vpop.f32.mrb[0].mxu0
        %2244 = vdwg.mxu0
        %v2245 = vsel %vm1287, %v2242, -inf
        %2246 = vmax.xlane.f32.xlu0 %v2245
        %v2247 = vpop.xlane.xlu0 %2246
        %v2248 = vsub.f32 %v2242, %v2247
        %v2249 = vmul.f32 %v2248, 1.442695
        %v2250 = vpow.pop %v2249
        %v2251 = vsel %vm1287, %v2250, 0.0
        %2252 = vadd.xlane.f32.xlu0 %v2251
        %v2253 = vpop.xlane.xlu0 %2252
        %v2254 = vrcp.pop %v2253
        %v2255 = vmul.f32 %v2250, %v2254
        %v2257 = vsel %vm1287, %v2255, 0
        %2259 = vmatprep.subr.mxu0 0.0
        %2260 = vmatpush1.msra.mxu0 %v571
        %2261 = vmatprep.subr.mxu0 0.0
        %2262 = vmatpush1.msra.mxu0 0.0
        %2263 = vmatprep.subr.mxu0 0.0
        %2264 = vmatpush1.msra.mxu0 0.0
        %2265 = vmatprep.subr.mxu0 0.0
        %2266 = vmatpush1.msra.mxu0 0.0
        %2267 = vmatprep.subr.mxu0 0.0
        %2268 = vmatpush1.msra.mxu0 0.0
        %2269 = vmatprep.subr.mxu0 0.0
        %2270 = vmatpush1.msra.mxu0 0.0
        %2271 = vmatprep.subr.mxu0 0.0
        %2272 = vmatpush1.msra.mxu0 0.0
        %2273 = vmatprep.subr.mxu0 0.0
        %2274 = vmatpush1.msra.mxu0 0.0
        %2275 = vmatprep.subr.mxu0 0.0
        %2276 = vmatpush1.msra.mxu0 0.0
        %2277 = vmatprep.subr.mxu0 0.0
        %2278 = vmatpush1.msra.mxu0 0.0
        %2279 = vmatprep.subr.mxu0 0.0
        %2280 = vmatpush1.msra.mxu0 0.0
        %2281 = vmatprep.subr.mxu0 0.0
        %2282 = vmatpush1.msra.mxu0 0.0
        %2283 = vmatprep.subr.mxu0 0.0
        %2284 = vmatpush1.msra.mxu0 0.0
        %2285 = vmatprep.subr.mxu0 0.0
        %2286 = vmatpush1.msra.mxu0 0.0
        %2287 = vmatprep.subr.mxu0 0.0
        %2288 = vmatpush1.msra.mxu0 0.0
        %2289 = vmatprep.subr.mxu0 0.0
        %2290 = vmatpush1.msra.mxu0 0.0
        %2291 = vmatprep.subr.mxu0 0.0
        %2292 = vmatpush1.msra.mxu0 0.0
        %2293 = vmatprep.subr.mxu0 0.0
        %2294 = vmatpush1.msra.mxu0 0.0
        %2295 = vmatprep.subr.mxu0 0.0
        %2296 = vmatpush1.msra.mxu0 0.0
        %2297 = vmatprep.subr.mxu0 0.0
        %2298 = vmatpush1.msra.mxu0 0.0
        %2299 = vmatprep.subr.mxu0 0.0
        %2300 = vmatpush1.msra.mxu0 0.0
        %2301 = vmatprep.subr.mxu0 0.0
        %2302 = vmatpush1.msra.mxu0 0.0
        %2303 = vmatprep.subr.mxu0 0.0
        %2304 = vmatpush1.msra.mxu0 0.0
        %2305 = vmatprep.subr.mxu0 0.0
        %2306 = vmatpush1.msra.mxu0 0.0
        %2307 = vmatprep.subr.mxu0 0.0
        %2308 = vmatpush1.msra.mxu0 0.0
        %2309 = vmatprep.subr.mxu0 0.0
        %2310 = vmatpush1.msra.mxu0 0.0
        %2311 = vmatprep.subr.mxu0 0.0
        %2312 = vmatpush1.msra.mxu0 0.0
        %2313 = vmatprep.subr.mxu0 0.0
        %2314 = vmatpush1.msra.mxu0 0.0
        %2315 = vmatprep.subr.mxu0 0.0
        %2316 = vmatpush1.msra.mxu0 0.0
        %2317 = vmatprep.subr.mxu0 0.0
        %2318 = vmatpush1.msra.mxu0 0.0
        %2319 = vmatprep.subr.mxu0 0.0
        %2320 = vmatpush1.msra.mxu0 0.0
        %2321 = vmatprep.subr.mxu0 0.0
        %2322 = vmatpush1.msra.mxu0 0.0
        %2323 = vmatprep.mubr.f32.mxu0 0.0
        %2324 = vmatmul.mubr.f32.gmra.mrb[0].mxu0 %v2257
        %v2325 = vpop.f32.mrb[0].mxu0
        %v2326 = vadd.f32 0.0, %v2325
        %v2327 = vpop.f32.mrb[0].mxu0
        %2328 = vdwg.mxu0
        %2329 = vrot.lane.b32.xlu0 %v429, 64
        %v2330 = vpop.permute.xlu0 %2329
        %v2331 = vsel %vm285, %v2330, 0
        %2333 = vmatprep.subr.mxu0 0.0
        %2334 = vmatpush1.msra.mxu0 %v1176
        %2335 = vmatprep.subr.mxu0 0.0
        %2336 = vmatpush1.msra.mxu0 %v1181
        %2337 = vmatprep.subr.mxu0 0.0
        %2338 = vmatpush1.msra.mxu0 %v1186
        %2339 = vmatprep.subr.mxu0 0.0
        %2340 = vmatpush1.msra.mxu0 %v1191
        %2341 = vmatprep.subr.mxu0 0.0
        %2342 = vmatpush1.msra.mxu0 %v1196
        %2343 = vmatprep.subr.mxu0 0.0
        %2344 = vmatpush1.msra.mxu0 %v1201
        %2345 = vmatprep.subr.mxu0 0.0
        %2346 = vmatpush1.msra.mxu0 %v1206
        %2347 = vmatprep.subr.mxu0 0.0
        %2348 = vmatpush1.msra.mxu0 %v1211
        %2349 = vmatprep.subr.mxu0 0.0
        %2350 = vmatpush1.msra.mxu0 0.0
        %2351 = vmatprep.subr.mxu0 0.0
        %2352 = vmatpush1.msra.mxu0 0.0
        %2353 = vmatprep.subr.mxu0 0.0
        %2354 = vmatpush1.msra.mxu0 0.0
        %2355 = vmatprep.subr.mxu0 0.0
        %2356 = vmatpush1.msra.mxu0 0.0
        %2357 = vmatprep.subr.mxu0 0.0
        %2358 = vmatpush1.msra.mxu0 0.0
        %2359 = vmatprep.subr.mxu0 0.0
        %2360 = vmatpush1.msra.mxu0 0.0
        %2361 = vmatprep.subr.mxu0 0.0
        %2362 = vmatpush1.msra.mxu0 0.0
        %2363 = vmatprep.subr.mxu0 0.0
        %2364 = vmatpush1.msra.mxu0 0.0
        %2365 = vmatprep.subr.mxu0 0.0
        %2366 = vmatpush1.msra.mxu0 0.0
        %2367 = vmatprep.subr.mxu0 0.0
        %2368 = vmatpush1.msra.mxu0 0.0
        %2369 = vmatprep.subr.mxu0 0.0
        %2370 = vmatpush1.msra.mxu0 0.0
        %2371 = vmatprep.subr.mxu0 0.0
        %2372 = vmatpush1.msra.mxu0 0.0
        %2373 = vmatprep.subr.mxu0 0.0
        %2374 = vmatpush1.msra.mxu0 0.0
        %2375 = vmatprep.subr.mxu0 0.0
        %2376 = vmatpush1.msra.mxu0 0.0
        %2377 = vmatprep.subr.mxu0 0.0
        %2378 = vmatpush1.msra.mxu0 0.0
        %2379 = vmatprep.subr.mxu0 0.0
        %2380 = vmatpush1.msra.mxu0 0.0
        %2381 = vmatprep.subr.mxu0 0.0
        %2382 = vmatpush1.msra.mxu0 0.0
        %2383 = vmatprep.subr.mxu0 0.0
        %2384 = vmatpush1.msra.mxu0 0.0
        %2385 = vmatprep.subr.mxu0 0.0
        %2386 = vmatpush1.msra.mxu0 0.0
        %2387 = vmatprep.subr.mxu0 0.0
        %2388 = vmatpush1.msra.mxu0 0.0
        %2389 = vmatprep.subr.mxu0 0.0
        %2390 = vmatpush1.msra.mxu0 0.0
        %2391 = vmatprep.subr.mxu0 0.0
        %2392 = vmatpush1.msra.mxu0 0.0
        %2393 = vmatprep.subr.mxu0 0.0
        %2394 = vmatpush1.msra.mxu0 0.0
        %2395 = vmatprep.subr.mxu0 0.0
        %2396 = vmatpush1.msra.mxu0 0.0
        %2397 = vmatprep.mubr.f32.mxu0 0.0
        %2398 = vmatmul.mubr.f32.gmra.mrb[0].mxu0 %v2331
        %v2399 = vpop.f32.mrb[0].mxu0
        %v2400 = vadd.f32 0.0, %v2399
        %v2401 = vpop.f32.mrb[0].mxu0
        %2402 = vdwg.mxu0
        %v2403 = vsel %vm1287, %v2400, -inf
        %2404 = vmax.xlane.f32.xlu0 %v2403
        %v2405 = vpop.xlane.xlu0 %2404
        %v2406 = vsub.f32 %v2400, %v2405
        %v2407 = vmul.f32 %v2406, 1.442695
        %v2408 = vpow.pop %v2407
        %v2409 = vsel %vm1287, %v2408, 0.0
        %2410 = vadd.xlane.f32.xlu0 %v2409
        %v2411 = vpop.xlane.xlu0 %2410
        %v2412 = vrcp.pop %v2411
        %v2413 = vmul.f32 %v2408, %v2412
        %2415 = vrot.lane.b32.xlu0 %v571, 64
        %v2416 = vpop.permute.xlu0 %2415
        %v2419 = vsel %vm1287, %v2413, 0
        %2421 = vmatprep.subr.mxu0 0.0
        %2422 = vmatpush1.msra.mxu0 %v2416
        %2423 = vmatprep.subr.mxu0 0.0
        %2424 = vmatpush1.msra.mxu0 0.0
        %2425 = vmatprep.subr.mxu0 0.0
        %2426 = vmatpush1.msra.mxu0 0.0
        %2427 = vmatprep.subr.mxu0 0.0
        %2428 = vmatpush1.msra.mxu0 0.0
        %2429 = vmatprep.subr.mxu0 0.0
        %2430 = vmatpush1.msra.mxu0 0.0
        %2431 = vmatprep.subr.mxu0 0.0
        %2432 = vmatpush1.msra.mxu0 0.0
        %2433 = vmatprep.subr.mxu0 0.0
        %2434 = vmatpush1.msra.mxu0 0.0
        %2435 = vmatprep.subr.mxu0 0.0
        %2436 = vmatpush1.msra.mxu0 0.0
        %2437 = vmatprep.subr.mxu0 0.0
        %2438 = vmatpush1.msra.mxu0 0.0
        %2439 = vmatprep.subr.mxu0 0.0
        %2440 = vmatpush1.msra.mxu0 0.0
        %2441 = vmatprep.subr.mxu0 0.0
        %2442 = vmatpush1.msra.mxu0 0.0
        %2443 = vmatprep.subr.mxu0 0.0
        %2444 = vmatpush1.msra.mxu0 0.0
        %2445 = vmatprep.subr.mxu0 0.0
        %2446 = vmatpush1.msra.mxu0 0.0
        %2447 = vmatprep.subr.mxu0 0.0
        %2448 = vmatpush1.msra.mxu0 0.0
        %2449 = vmatprep.subr.mxu0 0.0
        %2450 = vmatpush1.msra.mxu0 0.0
        %2451 = vmatprep.subr.mxu0 0.0
        %2452 = vmatpush1.msra.mxu0 0.0
        %2453 = vmatprep.subr.mxu0 0.0
        %2454 = vmatpush1.msra.mxu0 0.0
        %2455 = vmatprep.subr.mxu0 0.0
        %2456 = vmatpush1.msra.mxu0 0.0
        %2457 = vmatprep.subr.mxu0 0.0
        %2458 = vmatpush1.msra.mxu0 0.0
        %2459 = vmatprep.subr.mxu0 0.0
        %2460 = vmatpush1.msra.mxu0 0.0
        %2461 = vmatprep.subr.mxu0 0.0
        %2462 = vmatpush1.msra.mxu0 0.0
        %2463 = vmatprep.subr.mxu0 0.0
        %2464 = vmatpush1.msra.mxu0 0.0
        %2465 = vmatprep.subr.mxu0 0.0
        %2466 = vmatpush1.msra.mxu0 0.0
        %2467 = vmatprep.subr.mxu0 0.0
        %2468 = vmatpush1.msra.mxu0 0.0
        %2469 = vmatprep.subr.mxu0 0.0
        %2470 = vmatpush1.msra.mxu0 0.0
        %2471 = vmatprep.subr.mxu0 0.0
        %2472 = vmatpush1.msra.mxu0 0.0
        %2473 = vmatprep.subr.mxu0 0.0
        %2474 = vmatpush1.msra.mxu0 0.0
        %2475 = vmatprep.subr.mxu0 0.0
        %2476 = vmatpush1.msra.mxu0 0.0
        %2477 = vmatprep.subr.mxu0 0.0
        %2478 = vmatpush1.msra.mxu0 0.0
        %2479 = vmatprep.subr.mxu0 0.0
        %2480 = vmatpush1.msra.mxu0 0.0
        %2481 = vmatprep.subr.mxu0 0.0
        %2482 = vmatpush1.msra.mxu0 0.0
        %2483 = vmatprep.subr.mxu0 0.0
        %2484 = vmatpush1.msra.mxu0 0.0
        %2485 = vmatprep.mubr.f32.mxu0 0.0
        %2486 = vmatmul.mubr.f32.gmra.mrb[0].mxu0 %v2419
        %v2487 = vpop.f32.mrb[0].mxu0
        %v2488 = vadd.f32 0.0, %v2487
        %v2489 = vpop.f32.mrb[0].mxu0
        %2490 = vdwg.mxu0
        %2492 = vrot.lane.b32.xlu0 %v1531, 64
        %v2493 = vpop.permute.xlu0 %2492
        %2496 = vrot.lane.b32.xlu0 %v1850, 64
        %v2497 = vpop.permute.xlu0 %2496
        %2500 = vrot.lane.b32.xlu0 %v2169, 64
        %v2501 = vpop.permute.xlu0 %2500
        %2504 = vrot.lane.b32.xlu0 %v2488, 64
        %v2505 = vpop.permute.xlu0 %2504
        %v2507 = vsel %vm285, %v1369, %v2493
        %v2508 = vsel %vm285, %v1688, %v2497
        %v2509 = vsel %vm285, %v2007, %v2501
        %v2510 = vsel %vm285, %v2326, %v2505
        %v2511 = vld [vmem:[%s3] sm:$0xff]
        %v2512 = vld [vmem:[%s3 + $0x8] sm:$0xff]
        %v2513 = vld [vmem:[%s3 + $0x10] sm:$0xff]
        %v2514 = vld [vmem:[%s3 + $0x18] sm:$0xff]
        %v2515 = vld [vmem:[%s3 + $0x20] sm:$0xff]
        %v2516 = vld [vmem:[%s3 + $0x28] sm:$0xff]
        %v2517 = vld [vmem:[%s3 + $0x30] sm:$0xff]
        %v2518 = vld [vmem:[%s3 + $0x38] sm:$0xff]
        %v2519 = vld [vmem:[%s3 + $0x40] sm:$0xff]
        %v2520 = vld [vmem:[%s3 + $0x48] sm:$0xff]
        %v2521 = vld [vmem:[%s3 + $0x50] sm:$0xff]
        %v2522 = vld [vmem:[%s3 + $0x58] sm:$0xff]
        %v2523 = vld [vmem:[%s3 + $0x60] sm:$0xff]
        %v2524 = vld [vmem:[%s3 + $0x68] sm:$0xff]
        %v2525 = vld [vmem:[%s3 + $0x70] sm:$0xff]
        %v2526 = vld [vmem:[%s3 + $0x78] sm:$0xff]
        %v2527 = vld [vmem:[%s3 + $0x80] sm:$0xff]
        %v2528 = vld [vmem:[%s3 + $0x88] sm:$0xff]
        %v2529 = vld [vmem:[%s3 + $0x90] sm:$0xff]
        %v2530 = vld [vmem:[%s3 + $0x98] sm:$0xff]
        %v2531 = vld [vmem:[%s3 + $0xa0] sm:$0xff]
        %v2532 = vld [vmem:[%s3 + $0xa8] sm:$0xff]
        %v2533 = vld [vmem:[%s3 + $0xb0] sm:$0xff]
        %v2534 = vld [vmem:[%s3 + $0xb8] sm:$0xff]
        %v2535 = vld [vmem:[%s3 + $0xc0] sm:$0xff]
        %v2536 = vld [vmem:[%s3 + $0xc8] sm:$0xff]
        %v2537 = vld [vmem:[%s3 + $0xd0] sm:$0xff]
        %v2538 = vld [vmem:[%s3 + $0xd8] sm:$0xff]
        %v2539 = vld [vmem:[%s3 + $0xe0] sm:$0xff]
        %v2540 = vld [vmem:[%s3 + $0xe8] sm:$0xff]
        %v2541 = vld [vmem:[%s3 + $0xf0] sm:$0xff]
        %v2542 = vld [vmem:[%s3 + $0xf8] sm:$0xff]
        %v2543 = vld [vmem:[%s3 + $0x100] sm:$0xff]
        %v2544 = vld [vmem:[%s3 + $0x108] sm:$0xff]
        %v2545 = vld [vmem:[%s3 + $0x110] sm:$0xff]
        %v2546 = vld [vmem:[%s3 + $0x118] sm:$0xff]
        %v2547 = vld [vmem:[%s3 + $0x120] sm:$0xff]
        %v2548 = vld [vmem:[%s3 + $0x128] sm:$0xff]
        %v2549 = vld [vmem:[%s3 + $0x130] sm:$0xff]
        %v2550 = vld [vmem:[%s3 + $0x138] sm:$0xff]
        %v2551 = vld [vmem:[%s3 + $0x140] sm:$0xff]
        %v2552 = vld [vmem:[%s3 + $0x148] sm:$0xff]
        %v2553 = vld [vmem:[%s3 + $0x150] sm:$0xff]
        %v2554 = vld [vmem:[%s3 + $0x158] sm:$0xff]
        %v2555 = vld [vmem:[%s3 + $0x160] sm:$0xff]
        %v2556 = vld [vmem:[%s3 + $0x168] sm:$0xff]
        %v2557 = vld [vmem:[%s3 + $0x170] sm:$0xff]
        %v2558 = vld [vmem:[%s3 + $0x178] sm:$0xff]
        %v2559 = vld [vmem:[%s3 + $0x180] sm:$0xff]
        %v2560 = vld [vmem:[%s3 + $0x188] sm:$0xff]
        %v2561 = vld [vmem:[%s3 + $0x190] sm:$0xff]
        %v2562 = vld [vmem:[%s3 + $0x198] sm:$0xff]
        %v2563 = vld [vmem:[%s3 + $0x1a0] sm:$0xff]
        %v2564 = vld [vmem:[%s3 + $0x1a8] sm:$0xff]
        %v2565 = vld [vmem:[%s3 + $0x1b0] sm:$0xff]
        %v2566 = vld [vmem:[%s3 + $0x1b8] sm:$0xff]
        %v2567 = vld [vmem:[%s3 + $0x1c0] sm:$0xff]
        %v2568 = vld [vmem:[%s3 + $0x1c8] sm:$0xff]
        %v2569 = vld [vmem:[%s3 + $0x1d0] sm:$0xff]
        %v2570 = vld [vmem:[%s3 + $0x1d8] sm:$0xff]
        %v2571 = vld [vmem:[%s3 + $0x1e0] sm:$0xff]
        %v2572 = vld [vmem:[%s3 + $0x1e8] sm:$0xff]
        %v2573 = vld [vmem:[%s3 + $0x1f0] sm:$0xff]
        %v2574 = vld [vmem:[%s3 + $0x1f8] sm:$0xff]
        %v2575 = vld [vmem:[%s4] sm:$0x1]
        %v2577 = vlaneseq
        %v2578 = vshrl.u32 %v2577, 7
        %v2579 = vsub.s32 0, %v2578
        %v2580 = vrot.slane %v2575, %v2579
        %2582 = vmatprep.subr.mxu0 0.0
        %2583 = vmatpush1.msra.mxu0 %v2511
        %2584 = vmatprep.subr.mxu0 0.0
        %2585 = vmatpush1.msra.mxu0 %v2512
        %2586 = vmatprep.subr.mxu0 0.0
        %2587 = vmatpush1.msra.mxu0 %v2513
        %2588 = vmatprep.subr.mxu0 0.0
        %2589 = vmatpush1.msra.mxu0 %v2514
        %2590 = vmatprep.subr.mxu0 0.0
        %2591 = vmatpush1.msra.mxu0 %v2515
        %2592 = vmatprep.subr.mxu0 0.0
        %2593 = vmatpush1.msra.mxu0 %v2516
        %2594 = vmatprep.subr.mxu0 0.0
        %2595 = vmatpush1.msra.mxu0 %v2517
        %2596 = vmatprep.subr.mxu0 0.0
        %2597 = vmatpush1.msra.mxu0 %v2518
        %2598 = vmatprep.subr.mxu0 0.0
        %2599 = vmatpush1.msra.mxu0 %v2519
        %2600 = vmatprep.subr.mxu0 0.0
        %2601 = vmatpush1.msra.mxu0 %v2520
        %2602 = vmatprep.subr.mxu0 0.0
        %2603 = vmatpush1.msra.mxu0 %v2521
        %2604 = vmatprep.subr.mxu0 0.0
        %2605 = vmatpush1.msra.mxu0 %v2522
        %2606 = vmatprep.subr.mxu0 0.0
        %2607 = vmatpush1.msra.mxu0 %v2523
        %2608 = vmatprep.subr.mxu0 0.0
        %2609 = vmatpush1.msra.mxu0 %v2524
        %2610 = vmatprep.subr.mxu0 0.0
        %2611 = vmatpush1.msra.mxu0 %v2525
        %2612 = vmatprep.subr.mxu0 0.0
        %2613 = vmatpush1.msra.mxu0 %v2526
        %2614 = vmatprep.subr.mxu0 0.0
        %2615 = vmatpush1.msra.mxu0 %v2527
        %2616 = vmatprep.subr.mxu0 0.0
        %2617 = vmatpush1.msra.mxu0 %v2528
        %2618 = vmatprep.subr.mxu0 0.0
        %2619 = vmatpush1.msra.mxu0 %v2529
        %2620 = vmatprep.subr.mxu0 0.0
        %2621 = vmatpush1.msra.mxu0 %v2530
        %2622 = vmatprep.subr.mxu0 0.0
        %2623 = vmatpush1.msra.mxu0 %v2531
        %2624 = vmatprep.subr.mxu0 0.0
        %2625 = vmatpush1.msra.mxu0 %v2532
        %2626 = vmatprep.subr.mxu0 0.0
        %2627 = vmatpush1.msra.mxu0 %v2533
        %2628 = vmatprep.subr.mxu0 0.0
        %2629 = vmatpush1.msra.mxu0 %v2534
        %2630 = vmatprep.subr.mxu0 0.0
        %2631 = vmatpush1.msra.mxu0 %v2535
        %2632 = vmatprep.subr.mxu0 0.0
        %2633 = vmatpush1.msra.mxu0 %v2536
        %2634 = vmatprep.subr.mxu0 0.0
        %2635 = vmatpush1.msra.mxu0 %v2537
        %2636 = vmatprep.subr.mxu0 0.0
        %2637 = vmatpush1.msra.mxu0 %v2538
        %2638 = vmatprep.subr.mxu0 0.0
        %2639 = vmatpush1.msra.mxu0 %v2539
        %2640 = vmatprep.subr.mxu0 0.0
        %2641 = vmatpush1.msra.mxu0 %v2540
        %2642 = vmatprep.subr.mxu0 0.0
        %2643 = vmatpush1.msra.mxu0 %v2541
        %2644 = vmatprep.subr.mxu0 0.0
        %2645 = vmatpush1.msra.mxu0 %v2542
        %2646 = vmatprep.mubr.f32.mxu0 %v2508
        %2647 = vmatmul.mubr.f32.gmra.mrb[0].mxu0 %v2507
        %v2648 = vpop.f32.mrb[0].mxu0
        %v2649 = vadd.f32 %v2580, %v2648
        %v2650 = vpop.f32.mrb[0].mxu0
        %2651 = vdwg.mxu0
        %2652 = vmatprep.subr.mxu0 0.0
        %2653 = vmatpush1.msra.mxu0 %v2543
        %2654 = vmatprep.subr.mxu0 0.0
        %2655 = vmatpush1.msra.mxu0 %v2544
        %2656 = vmatprep.subr.mxu0 0.0
        %2657 = vmatpush1.msra.mxu0 %v2545
        %2658 = vmatprep.subr.mxu0 0.0
        %2659 = vmatpush1.msra.mxu0 %v2546
        %2660 = vmatprep.subr.mxu0 0.0
        %2661 = vmatpush1.msra.mxu0 %v2547
        %2662 = vmatprep.subr.mxu0 0.0
        %2663 = vmatpush1.msra.mxu0 %v2548
        %2664 = vmatprep.subr.mxu0 0.0
        %2665 = vmatpush1.msra.mxu0 %v2549
        %2666 = vmatprep.subr.mxu0 0.0
        %2667 = vmatpush1.msra.mxu0 %v2550
        %2668 = vmatprep.subr.mxu0 0.0
        %2669 = vmatpush1.msra.mxu0 %v2551
        %2670 = vmatprep.subr.mxu0 0.0
        %2671 = vmatpush1.msra.mxu0 %v2552
        %2672 = vmatprep.subr.mxu0 0.0
        %2673 = vmatpush1.msra.mxu0 %v2553
        %2674 = vmatprep.subr.mxu0 0.0
        %2675 = vmatpush1.msra.mxu0 %v2554
        %2676 = vmatprep.subr.mxu0 0.0
        %2677 = vmatpush1.msra.mxu0 %v2555
        %2678 = vmatprep.subr.mxu0 0.0
        %2679 = vmatpush1.msra.mxu0 %v2556
        %2680 = vmatprep.subr.mxu0 0.0
        %2681 = vmatpush1.msra.mxu0 %v2557
        %2682 = vmatprep.subr.mxu0 0.0
        %2683 = vmatpush1.msra.mxu0 %v2558
        %2684 = vmatprep.subr.mxu0 0.0
        %2685 = vmatpush1.msra.mxu0 %v2559
        %2686 = vmatprep.subr.mxu0 0.0
        %2687 = vmatpush1.msra.mxu0 %v2560
        %2688 = vmatprep.subr.mxu0 0.0
        %2689 = vmatpush1.msra.mxu0 %v2561
        %2690 = vmatprep.subr.mxu0 0.0
        %2691 = vmatpush1.msra.mxu0 %v2562
        %2692 = vmatprep.subr.mxu0 0.0
        %2693 = vmatpush1.msra.mxu0 %v2563
        %2694 = vmatprep.subr.mxu0 0.0
        %2695 = vmatpush1.msra.mxu0 %v2564
        %2696 = vmatprep.subr.mxu0 0.0
        %2697 = vmatpush1.msra.mxu0 %v2565
        %2698 = vmatprep.subr.mxu0 0.0
        %2699 = vmatpush1.msra.mxu0 %v2566
        %2700 = vmatprep.subr.mxu0 0.0
        %2701 = vmatpush1.msra.mxu0 %v2567
        %2702 = vmatprep.subr.mxu0 0.0
        %2703 = vmatpush1.msra.mxu0 %v2568
        %2704 = vmatprep.subr.mxu0 0.0
        %2705 = vmatpush1.msra.mxu0 %v2569
        %2706 = vmatprep.subr.mxu0 0.0
        %2707 = vmatpush1.msra.mxu0 %v2570
        %2708 = vmatprep.subr.mxu0 0.0
        %2709 = vmatpush1.msra.mxu0 %v2571
        %2710 = vmatprep.subr.mxu0 0.0
        %2711 = vmatpush1.msra.mxu0 %v2572
        %2712 = vmatprep.subr.mxu0 0.0
        %2713 = vmatpush1.msra.mxu0 %v2573
        %2714 = vmatprep.subr.mxu0 0.0
        %2715 = vmatpush1.msra.mxu0 %v2574
        %2716 = vmatprep.mubr.f32.mxu0 %v2510
        %2717 = vmatmul.mubr.f32.gmra.mrb[0].mxu0 %v2509
        %v2718 = vpop.f32.mrb[0].mxu0
        %v2719 = vadd.f32 %v2649, %v2718
        %v2720 = vpop.f32.mrb[0].mxu0
        %2721 = vdwg.mxu0
        %2722 = vst.msk [vmem:[%s215] sm:$0xff] %vm285, %v2719
        %s2723 = sand.u32 %s137, 1
        %s2724 = scalar_lea.sflag [#allocation3], %s2723
        %s2725 = sand.u32 %s137, 1
        %s2726 = smul.addr %s2725, 8
        %s2727 = scalar_lea.vmem [#allocation2], %s2726
        // Predicated region
        $region41: #{tpu_custom_call.1} parent=39 // pred_check
          %p2728 = pneg %p147
        $region42: #{tpu_custom_call.1} parent=39 // pred_check_branch
          %2730 = sbr.rel (%p2728) target = $region44
        $region43: #{tpu_custom_call.1} parent=39 // pred_region
          %s2732 = ssub.s32 128, 128
          %2733 = vsyncadd %s2724, %s2732
          %s2734 = smul.addr %s19, 128
          %s2735 = scalar_lea.hbm %s5, %s2734
          %s2737 = sshll.u32 %s2727, 4
          %s2738 = int_to_ptr.vmem [resolvable:$true] %s2737
          %2740 = dma.vmem_to_hbm [thread:$0]  %s2738, 128, %s2735, %s2724
        $region44: #{tpu_custom_call.1} parent=39 // pred_fallthru
          _
      $region40: #{tpu_custom_call.1} parent=5 // pred_fallthru
        _
      %p2741 = scmp.le.s32.totalorder 2, %s14
      // Predicated region
      $region45: #{tpu_custom_call.1} parent=5 // pred_check
        %p2742 = pneg %p2741
      $region46: #{tpu_custom_call.1} parent=5 // pred_check_branch
        %2744 = sbr.rel (%p2742) target = $region48
      $region47: #{tpu_custom_call.1} parent=5 // pred_region
        %s2745 = ssub.s32 %s14, 2
        // Predicated region
        $region49: #{tpu_custom_call.1} parent=47 // pred_check
          %p2746 = pneg %p153
        $region50: #{tpu_custom_call.1} parent=47 // pred_check_branch
          %2748 = sbr.rel (%p2746) target = $region52
        $region51: #{tpu_custom_call.1} parent=47 // pred_region
          %s2749 = sand.u32 %s138, 1
          %s2750 = scalar_lea.sflag [#allocation3], %s2749
          %s2751 = sand.u32 %s138, 1
          %s2752 = smul.addr %s2751, 8
          %s2753 = scalar_lea.vmem [#allocation2], %s2752
          %2754 = dma.done %s2750, 128
        $region52: #{tpu_custom_call.1} parent=47 // pred_fallthru
          _
      $region48: #{tpu_custom_call.1} parent=5 // pred_fallthru
        _
    $region6: #{tpu_custom_call.1} parent=1 // loop_footer
      %s18 = sadd.s32 1, %s14
    $region7: #{tpu_custom_call.1} parent=1 // loop_footer_branch
      %13 = sbr.rel target = $region3
    $region8: #{tpu_custom_call.1} parent=1 // loop_exit
      _
    %2755 = vsyncpa [#allocation3], 1
    %s2756 = scalar_lea.sflag [#allocation3], 1
    %2757 = vsyncpa %s2756, 1

</llo_original>
